<compile_context>
chip_gen: v5e
topology: v5e:2x2
jax: 0.10.0
libtpu: 0.0.40
codegen_flags: <defaults>
</compile_context>

<pallas_src>
import jax
import jax.numpy as jnp
import numpy as np
from jax.experimental import pallas as pl
from jax.experimental.pallas import tpu as pltpu

EPS = 1e-5


def _make_kernel(heads: int):
    def kernel(x_ref, lat_ref, gm_ref, bm_ref, gl_ref, bl_ref,
               wq_ref, wkv_ref, wo_ref, o_ref):
        Bt, m, D = x_ref.shape
        n = lat_ref.shape[1]
        S = n + m
        inner = wq_ref.shape[1]
        hd = inner // heads
        cdt = wq_ref.dtype                      # MXU compute dtype (bf16)

        def layernorm(t, g, b):                 # f32, biased var (= nn.LayerNorm)
            mu = jnp.mean(t, axis=-1, keepdims=True)
            var = jnp.mean((t - mu) * (t - mu), axis=-1, keepdims=True)
            return (t - mu) * jax.lax.rsqrt(var + EPS) * g + b

        # Activations streamed bf16; upcast to f32 for the LN math.
        x2 = x_ref[...].reshape(Bt * m, D).astype(jnp.float32)
        lat2 = lat_ref[...].reshape(Bt * n, D).astype(jnp.float32)
        xn = layernorm(x2, gm_ref[...], bm_ref[...]).astype(cdt)      # (Bt*m, D)
        latn = layernorm(lat2, gl_ref[...], bl_ref[...]).astype(cdt)  # (Bt*n, D)

        # ---- lane-dense 2D projections (scale folded into Wq), one cast each --
        q = jnp.dot(latn, wq_ref[...],
                    preferred_element_type=jnp.float32).astype(cdt)    # (Bt*n, I)
        kv_lat = jnp.dot(latn, wkv_ref[...],
                         preferred_element_type=jnp.float32).astype(cdt)  # (Bt*n, 2I)
        kv_med = jnp.dot(xn, wkv_ref[...],
                         preferred_element_type=jnp.float32).astype(cdt)  # (Bt*m, 2I)

        def to_heads(t, rows):
            # (rows, inner) -> (heads, rows, hd): 2D transpose (XLU), free
            # leading-dim split (hd multiple of 8), batched minor-dim transpose.
            return jnp.swapaxes(t.T.reshape(heads, hd, rows), 1, 2)

        # ---- attention: heads as the single dot batch dim, per batch element --
        outs = []
        for b in range(Bt):                       # static, small (batch_block)
            q_b = q[b * n:(b + 1) * n, :]                               # (n, I)
            kv_b = jnp.concatenate([kv_lat[b * n:(b + 1) * n, :],
                                    kv_med[b * m:(b + 1) * m, :]],
                                   axis=0)                              # (S, 2I)
            qh = to_heads(q_b, n)                                       # (H, n, hd)
            kh = to_heads(kv_b[:, :inner], S)                           # (H, S, hd)
            vh = to_heads(kv_b[:, inner:], S)                           # (H, S, hd)

            s = jnp.einsum('hqd,hkd->hqk', qh, kh,
                           preferred_element_type=jnp.float32)          # (H, n, S)
            s = s - jnp.max(s, axis=-1, keepdims=True)
            p = jnp.exp(s)
            p = p * pl.reciprocal(jnp.sum(p, axis=-1, keepdims=True), approx=True)

            o = jnp.einsum('hqk,hkd->hqd', p.astype(cdt), vh,
                           preferred_element_type=jnp.float32)          # (H, n, hd)
            # (H, n, hd) -> (n, inner) == concat-heads on the lane axis.
            outs.append(jnp.swapaxes(o, 1, 2).reshape(inner, n).T)      # (n, I) f32

        # ---- single K=inner output projection (no per-head matmuls / reduce) --
        o_cat = jnp.concatenate(outs, axis=0).astype(cdt)               # (Bt*n, I)
        out = jnp.dot(o_cat, wo_ref[...],
                      preferred_element_type=jnp.float32)               # (Bt*n, D)
        o_ref[...] = out.reshape(Bt, n, D).astype(o_ref.dtype)

    return kernel


def _vmem_limit_bytes():
    """Generation-aware VMEM budget: ~75% of capacity (≈48 MiB on 64 MiB v7x,
    ≈96 MiB on 128 MiB v5e/v6e), leaving double-buffer headroom."""
    try:
        cap = pltpu.get_tpu_info().vmem_capacity_bytes
    except Exception:
        cap = 128 * 1024 * 1024
    return int(min(0.75 * cap, 100 * 1024 * 1024))


def perceiver_attention(x, latents, params, *, heads, batch_block=None):
    """x: (B, m, D) media tokens; latents: (B, n, D). Returns (B, n, D) f32."""
    B, m, D = x.shape
    _, n, _ = latents.shape
    if batch_block is None:
        batch_block = 2 if B % 2 == 0 else 1
    Bt = batch_block
    assert B % Bt == 0, "batch_block must divide batch"
    grid = (B // Bt,)

    # Stream activations as bf16 (halves HBM->VMEM traffic); f32 math inside.
    x_bf = x.astype(jnp.bfloat16)
    lat_bf = latents.astype(jnp.bfloat16)

    weights = [params["g_media"], params["b_media"],
               params["g_latents"], params["b_latents"],
               params["wq"], params["wkv"], params["wo"]]

    x_spec = pl.BlockSpec((Bt, m, D), lambda b: (b, 0, 0))
    lat_spec = pl.BlockSpec((Bt, n, D), lambda b: (b, 0, 0))
    # Constant index maps: weight tiles are not re-fetched across grid steps.
    w_specs = [pl.BlockSpec(w.shape, lambda b, nd=w.ndim: (0,) * nd)
               for w in weights]
    out_spec = pl.BlockSpec((Bt, n, D), lambda b: (b, 0, 0))

    return pl.pallas_call(
        _make_kernel(heads),
        out_shape=jax.ShapeDtypeStruct((B, n, D), jnp.float32),
        grid_spec=pltpu.PrefetchScalarGridSpec(
            num_scalar_prefetch=0,
            grid=grid,
            in_specs=[x_spec, lat_spec] + w_specs,
            out_specs=out_spec,
        ),
        compiler_params=pltpu.CompilerParams(
            dimension_semantics=("parallel",),
            vmem_limit_bytes=_vmem_limit_bytes(),
        ),
    )(x_bf, lat_bf, *weights)


def make_params(key, dim, heads, dim_head, *, compute_dtype=jnp.bfloat16):
    """Build PyTorch-shaped f32 params (for the reference) and kernel-ready
    2D lane-dense bf16 params (scale folded into Wq)."""
    inner = heads * dim_head
    scale = dim_head ** (-0.5)
    ks = jax.random.split(key, 7)

    # PyTorch Linear stores weight as (out, in); y = x @ W.T (all bias-free).
    wq = 0.05 * jax.random.normal(ks[0], (inner, dim), jnp.float32)
    wkv = 0.05 * jax.random.normal(ks[1], (2 * inner, dim), jnp.float32)
    wo = 0.05 * jax.random.normal(ks[2], (dim, inner), jnp.float32)
    g_media = 1.0 + 0.1 * jax.random.normal(ks[3], (dim,), jnp.float32)
    b_media = 0.1 * jax.random.normal(ks[4], (dim,), jnp.float32)
    g_latents = 1.0 + 0.1 * jax.random.normal(ks[5], (dim,), jnp.float32)
    b_latents = 0.1 * jax.random.normal(ks[6], (dim,), jnp.float32)

    kernel_params = {
        "g_media": g_media.reshape(1, dim), "b_media": b_media.reshape(1, dim),
        "g_latents": g_latents.reshape(1, dim), "b_latents": b_latents.reshape(1, dim),
        # 2D lane-dense layouts so y = x @ W.T becomes x @ W_stored.
        "wq": (wq.T * scale).astype(compute_dtype),     # (D, inner), scale folded
        "wkv": wkv.T.astype(compute_dtype),             # (D, 2*inner), [k | v] cols
        "wo": wo.T.astype(compute_dtype),               # (inner, D)
    }
    ref_params = {
        "wq": wq, "wkv": wkv, "wo": wo,
        "g_media": g_media, "b_media": b_media,
        "g_latents": g_latents, "b_latents": b_latents,
    }
    return kernel_params, ref_params


def reference(x, latents, rp, *, heads, dim_head):
    """Pure-JAX f32 mirror of the PyTorch forward (correctness check)."""
    def ln(t, g, b):
        mu = jnp.mean(t, axis=-1, keepdims=True)
        var = jnp.mean((t - mu) ** 2, axis=-1, keepdims=True)
        return (t - mu) / jnp.sqrt(var + EPS) * g + b

    B, m, D = x.shape
    n = latents.shape[1]
    inner = heads * dim_head
    scale = dim_head ** (-0.5)

    xn = ln(x, rp["g_media"], rp["b_media"])
    latn = ln(latents, rp["g_latents"], rp["b_latents"])
    q = latn @ rp["wq"].T
    kv_in = jnp.concatenate([latn, xn], axis=1)
    kv = kv_in @ rp["wkv"].T
    k, v = kv[..., :inner], kv[..., inner:]

    def split(t):
        return jnp.transpose(t.reshape(B, -1, heads, dim_head), (0, 2, 1, 3))

    q, k, v = split(q) * scale, split(k), split(v)
    sim = jnp.einsum('bhid,bhjd->bhij', q, k)
    sim = sim - jnp.max(sim, axis=-1, keepdims=True)
    attn = jax.nn.softmax(sim, axis=-1)
    out = jnp.einsum('bhij,bhjd->bhid', attn, v)
    out = jnp.transpose(out, (0, 2, 1, 3)).reshape(B, n, inner)
    return out @ rp["wo"].T


if __name__ == "__main__":
    B, M_MEDIA, N_LAT = 4, 16, 8
    DIM, HEADS, DIM_HEAD = 128, 4, 32        # inner_dim = 128 (lane-aligned)

    key = jax.random.PRNGKey(0)
    kx, kl, kp = jax.random.split(key, 3)
    x = jax.random.normal(kx, (B, M_MEDIA, DIM), jnp.float32)
    latents = jax.random.normal(kl, (B, N_LAT, DIM), jnp.float32)
    kparams, rparams = make_params(kp, DIM, HEADS, DIM_HEAD)

    # batch_block=2 -> grid=(2,): 2 batch elements per step, grid length even.
    out = perceiver_attention(x, latents, kparams, heads=HEADS, batch_block=2)
    out = jax.block_until_ready(out)

    ref = reference(x, latents, rparams, heads=HEADS, dim_head=DIM_HEAD)
    # Tolerance reflects bf16 activation streaming + bf16 MXU inputs (f32 accum).
    np.testing.assert_allclose(np.asarray(out), np.asarray(ref),
                               rtol=5e-2, atol=1e-2)
    print("KERNEL_OK")
</pallas_src>

<mosaic_0001>
module attributes {stable_mosaic.version = 11 : i64} {
  func.func @kernel(%arg0: i32, %arg1: memref<2x16x128xbf16, #tpu.memory_space<vmem>>, %arg2: memref<2x8x128xbf16, #tpu.memory_space<vmem>>, %arg3: memref<1x128xf32, #tpu.memory_space<vmem>>, %arg4: memref<1x128xf32, #tpu.memory_space<vmem>>, %arg5: memref<1x128xf32, #tpu.memory_space<vmem>>, %arg6: memref<1x128xf32, #tpu.memory_space<vmem>>, %arg7: memref<128x128xbf16, #tpu.memory_space<vmem>>, %arg8: memref<128x256xbf16, #tpu.memory_space<vmem>>, %arg9: memref<128x128xbf16, #tpu.memory_space<vmem>>, %arg10: memref<2x8x128xf32, #tpu.memory_space<vmem>>) attributes {dimension_semantics = [#tpu.dimension_semantics<parallel>], iteration_bounds = array<i64: 2>, scalar_prefetch = 0 : i64, scratch_operands = 0 : i64, tpu.core_type = #tpu.core_type<tc>, window_params = [{transform_indices = @transform_0, window_bounds = array<i64: 2, 16, 128>}, {transform_indices = @transform_1, window_bounds = array<i64: 2, 8, 128>}, {pipeline_mode = #tpu.pipeline_mode<synchronous>, transform_indices = @transform_2, window_bounds = array<i64: 1, 128>}, {pipeline_mode = #tpu.pipeline_mode<synchronous>, transform_indices = @transform_3, window_bounds = array<i64: 1, 128>}, {pipeline_mode = #tpu.pipeline_mode<synchronous>, transform_indices = @transform_4, window_bounds = array<i64: 1, 128>}, {pipeline_mode = #tpu.pipeline_mode<synchronous>, transform_indices = @transform_5, window_bounds = array<i64: 1, 128>}, {pipeline_mode = #tpu.pipeline_mode<synchronous>, transform_indices = @transform_6, window_bounds = array<i64: 128, 128>}, {pipeline_mode = #tpu.pipeline_mode<synchronous>, transform_indices = @transform_7, window_bounds = array<i64: 128, 256>}, {pipeline_mode = #tpu.pipeline_mode<synchronous>, transform_indices = @transform_8, window_bounds = array<i64: 128, 128>}, {transform_indices = @transform_9, window_bounds = array<i64: 2, 8, 128>}]} {
    %c0 = arith.constant 0 : index
    %c0_0 = arith.constant 0 : index
    %c0_1 = arith.constant 0 : index
    %0 = vector.load %arg1[%c0, %c0_0, %c0_1] : memref<2x16x128xbf16, #tpu.memory_space<vmem>>, vector<2x16x128xbf16>
    %1 = vector.shape_cast %0 : vector<2x16x128xbf16> to vector<32x128xbf16>
    %2 = arith.extf %1 : vector<32x128xbf16> to vector<32x128xf32>
    %c0_2 = arith.constant 0 : index
    %c0_3 = arith.constant 0 : index
    %c0_4 = arith.constant 0 : index
    %3 = vector.load %arg2[%c0_2, %c0_3, %c0_4] : memref<2x8x128xbf16, #tpu.memory_space<vmem>>, vector<2x8x128xbf16>
    %4 = vector.shape_cast %3 : vector<2x8x128xbf16> to vector<16x128xbf16>
    %5 = arith.extf %4 : vector<16x128xbf16> to vector<16x128xf32>
    %c0_5 = arith.constant 0 : index
    %c0_6 = arith.constant 0 : index
    %6 = vector.load %arg3[%c0_5, %c0_6] : memref<1x128xf32, #tpu.memory_space<vmem>>, vector<1x128xf32>
    %c0_7 = arith.constant 0 : index
    %c0_8 = arith.constant 0 : index
    %7 = vector.load %arg4[%c0_7, %c0_8] : memref<1x128xf32, #tpu.memory_space<vmem>>, vector<1x128xf32>
    %cst = arith.constant dense<0.000000e+00> : vector<32xf32>
    %8 = vector.multi_reduction <add>, %2, %cst [1] : vector<32x128xf32> to vector<32xf32>
    %9 = vector.shape_cast %8 : vector<32xf32> to vector<32x1xf32>
    %cst_9 = arith.constant 1.280000e+02 : f32
    %10 = vector.broadcast %cst_9 : f32 to vector<32x1xf32>
    %11 = arith.divf %9, %10 : vector<32x1xf32>
    %12 = vector.broadcast %11 : vector<32x1xf32> to vector<32x128xf32>
    %13 = arith.subf %2, %12 : vector<32x128xf32>
    %14 = vector.broadcast %11 : vector<32x1xf32> to vector<32x128xf32>
    %15 = arith.subf %2, %14 : vector<32x128xf32>
    %16 = arith.mulf %13, %15 : vector<32x128xf32>
    %cst_10 = arith.constant dense<0.000000e+00> : vector<32xf32>
    %17 = vector.multi_reduction <add>, %16, %cst_10 [1] : vector<32x128xf32> to vector<32xf32>
    %18 = vector.shape_cast %17 : vector<32xf32> to vector<32x1xf32>
    %cst_11 = arith.constant 1.280000e+02 : f32
    %19 = vector.broadcast %cst_11 : f32 to vector<32x1xf32>
    %20 = arith.divf %18, %19 : vector<32x1xf32>
    %21 = vector.broadcast %11 : vector<32x1xf32> to vector<32x128xf32>
    %22 = arith.subf %2, %21 : vector<32x128xf32>
    %cst_12 = arith.constant 9.99999974E-6 : f32
    %23 = vector.broadcast %cst_12 : f32 to vector<32x1xf32>
    %24 = arith.addf %20, %23 : vector<32x1xf32>
    %25 = math.rsqrt %24 : vector<32x1xf32>
    %26 = vector.broadcast %25 : vector<32x1xf32> to vector<32x128xf32>
    %27 = arith.mulf %22, %26 : vector<32x128xf32>
    %28 = vector.broadcast %6 : vector<1x128xf32> to vector<32x128xf32>
    %29 = arith.mulf %27, %28 : vector<32x128xf32>
    %30 = vector.broadcast %7 : vector<1x128xf32> to vector<32x128xf32>
    %31 = arith.addf %29, %30 : vector<32x128xf32>
    %32 = arith.truncf %31 : vector<32x128xf32> to vector<32x128xbf16>
    %c0_13 = arith.constant 0 : index
    %c0_14 = arith.constant 0 : index
    %33 = vector.load %arg5[%c0_13, %c0_14] : memref<1x128xf32, #tpu.memory_space<vmem>>, vector<1x128xf32>
    %c0_15 = arith.constant 0 : index
    %c0_16 = arith.constant 0 : index
    %34 = vector.load %arg6[%c0_15, %c0_16] : memref<1x128xf32, #tpu.memory_space<vmem>>, vector<1x128xf32>
    %cst_17 = arith.constant dense<0.000000e+00> : vector<16xf32>
    %35 = vector.multi_reduction <add>, %5, %cst_17 [1] : vector<16x128xf32> to vector<16xf32>
    %36 = vector.shape_cast %35 : vector<16xf32> to vector<16x1xf32>
    %cst_18 = arith.constant 1.280000e+02 : f32
    %37 = vector.broadcast %cst_18 : f32 to vector<16x1xf32>
    %38 = arith.divf %36, %37 : vector<16x1xf32>
    %39 = vector.broadcast %38 : vector<16x1xf32> to vector<16x128xf32>
    %40 = arith.subf %5, %39 : vector<16x128xf32>
    %41 = vector.broadcast %38 : vector<16x1xf32> to vector<16x128xf32>
    %42 = arith.subf %5, %41 : vector<16x128xf32>
    %43 = arith.mulf %40, %42 : vector<16x128xf32>
    %cst_19 = arith.constant dense<0.000000e+00> : vector<16xf32>
    %44 = vector.multi_reduction <add>, %43, %cst_19 [1] : vector<16x128xf32> to vector<16xf32>
    %45 = vector.shape_cast %44 : vector<16xf32> to vector<16x1xf32>
    %cst_20 = arith.constant 1.280000e+02 : f32
    %46 = vector.broadcast %cst_20 : f32 to vector<16x1xf32>
    %47 = arith.divf %45, %46 : vector<16x1xf32>
    %48 = vector.broadcast %38 : vector<16x1xf32> to vector<16x128xf32>
    %49 = arith.subf %5, %48 : vector<16x128xf32>
    %cst_21 = arith.constant 9.99999974E-6 : f32
    %50 = vector.broadcast %cst_21 : f32 to vector<16x1xf32>
    %51 = arith.addf %47, %50 : vector<16x1xf32>
    %52 = math.rsqrt %51 : vector<16x1xf32>
    %53 = vector.broadcast %52 : vector<16x1xf32> to vector<16x128xf32>
    %54 = arith.mulf %49, %53 : vector<16x128xf32>
    %55 = vector.broadcast %33 : vector<1x128xf32> to vector<16x128xf32>
    %56 = arith.mulf %54, %55 : vector<16x128xf32>
    %57 = vector.broadcast %34 : vector<1x128xf32> to vector<16x128xf32>
    %58 = arith.addf %56, %57 : vector<16x128xf32>
    %59 = arith.truncf %58 : vector<16x128xf32> to vector<16x128xbf16>
    %c0_22 = arith.constant 0 : index
    %c0_23 = arith.constant 0 : index
    %60 = vector.load %arg7[%c0_22, %c0_23] : memref<128x128xbf16, #tpu.memory_space<vmem>>, vector<128x128xbf16>
    %cst_24 = arith.constant dense<0.000000e+00> : vector<16x128xf32>
    %61 = tpu.matmul %59, %60, %cst_24 {dimension_numbers = #tpu.dot_dimension_numbers<[1], [0], [0], [1], [0, 0, 1, 1], [], []>} : vector<16x128xbf16>, vector<128x128xbf16>, vector<16x128xf32> -> vector<16x128xf32>
    %62 = arith.truncf %61 : vector<16x128xf32> to vector<16x128xbf16>
    %c0_25 = arith.constant 0 : index
    %c0_26 = arith.constant 0 : index
    %63 = vector.load %arg8[%c0_25, %c0_26] : memref<128x256xbf16, #tpu.memory_space<vmem>>, vector<128x256xbf16>
    %cst_27 = arith.constant dense<0.000000e+00> : vector<16x256xf32>
    %64 = tpu.matmul %59, %63, %cst_27 {dimension_numbers = #tpu.dot_dimension_numbers<[1], [0], [0], [1], [0, 0, 1, 1], [], []>} : vector<16x128xbf16>, vector<128x256xbf16>, vector<16x256xf32> -> vector<16x256xf32>
    %65 = arith.truncf %64 : vector<16x256xf32> to vector<16x256xbf16>
    %c0_28 = arith.constant 0 : index
    %c0_29 = arith.constant 0 : index
    %66 = vector.load %arg8[%c0_28, %c0_29] : memref<128x256xbf16, #tpu.memory_space<vmem>>, vector<128x256xbf16>
    %cst_30 = arith.constant dense<0.000000e+00> : vector<32x256xf32>
    %67 = tpu.matmul %32, %66, %cst_30 {dimension_numbers = #tpu.dot_dimension_numbers<[1], [0], [0], [1], [0, 0, 1, 1], [], []>} : vector<32x128xbf16>, vector<128x256xbf16>, vector<32x256xf32> -> vector<32x256xf32>
    %68 = arith.truncf %67 : vector<32x256xf32> to vector<32x256xbf16>
    %69 = vector.extract_strided_slice %62 {offsets = [0, 0], sizes = [8, 128], strides = [1, 1]} : vector<16x128xbf16> to vector<8x128xbf16>
    %70 = vector.extract_strided_slice %65 {offsets = [0, 0], sizes = [8, 256], strides = [1, 1]} : vector<16x256xbf16> to vector<8x256xbf16>
    %71 = vector.extract_strided_slice %68 {offsets = [0, 0], sizes = [16, 256], strides = [1, 1]} : vector<32x256xbf16> to vector<16x256xbf16>
    %72 = tpu.concatenate %70, %71 in 0 : vector<8x256xbf16>, vector<16x256xbf16> -> vector<24x256xbf16>
    %73 = tpu.transpose %69, [1, 0] : vector<8x128xbf16> -> vector<128x8xbf16>
    %74 = vector.shape_cast %73 : vector<128x8xbf16> to vector<4x32x8xbf16>
    %75 = tpu.transpose %74, [0, 2, 1] : vector<4x32x8xbf16> -> vector<4x8x32xbf16>
    %76 = vector.extract_strided_slice %72 {offsets = [0, 0], sizes = [24, 128], strides = [1, 1]} : vector<24x256xbf16> to vector<24x128xbf16>
    %77 = tpu.transpose %76, [1, 0] : vector<24x128xbf16> -> vector<128x24xbf16>
    %78 = vector.shape_cast %77 : vector<128x24xbf16> to vector<4x32x24xbf16>
    %79 = tpu.transpose %78, [0, 2, 1] : vector<4x32x24xbf16> -> vector<4x24x32xbf16>
    %80 = vector.extract_strided_slice %72 {offsets = [0, 128], sizes = [24, 128], strides = [1, 1]} : vector<24x256xbf16> to vector<24x128xbf16>
    %81 = tpu.transpose %80, [1, 0] : vector<24x128xbf16> -> vector<128x24xbf16>
    %82 = vector.shape_cast %81 : vector<128x24xbf16> to vector<4x32x24xbf16>
    %83 = tpu.transpose %82, [0, 2, 1] : vector<4x32x24xbf16> -> vector<4x24x32xbf16>
    "tpu.trace_start"() <{level = 10 : i32, message = "hqd,hkd->hqk"}> : () -> ()
    %cst_31 = arith.constant dense<0.000000e+00> : vector<4x8x24xf32>
    %84 = tpu.matmul %75, %79, %cst_31 {dimension_numbers = #tpu.dot_dimension_numbers<[2], [2], [1], [1], [0, 0, 0, 1, 1, 1], [0], [0]>} : vector<4x8x32xbf16>, vector<4x24x32xbf16>, vector<4x8x24xf32> -> vector<4x8x24xf32>
    "tpu.trace_stop"() : () -> ()
    %cst_32 = arith.constant dense<0xFF800000> : vector<4x8xf32>
    %85 = vector.multi_reduction <maximumf>, %84, %cst_32 [2] : vector<4x8x24xf32> to vector<4x8xf32>
    %86 = vector.shape_cast %85 : vector<4x8xf32> to vector<4x8x1xf32>
    %87 = vector.broadcast %86 : vector<4x8x1xf32> to vector<4x8x24xf32>
    %88 = arith.subf %84, %87 : vector<4x8x24xf32>
    %89 = math.exp %88 : vector<4x8x24xf32>
    %cst_33 = arith.constant dense<0.000000e+00> : vector<4x8xf32>
    %90 = vector.multi_reduction <add>, %89, %cst_33 [2] : vector<4x8x24xf32> to vector<4x8xf32>
    %91 = vector.shape_cast %90 : vector<4x8xf32> to vector<4x8x1xf32>
    %92 = tpu.reciprocal %91 {approx = true} : vector<4x8x1xf32> -> vector<4x8x1xf32>
    %93 = vector.broadcast %92 : vector<4x8x1xf32> to vector<4x8x24xf32>
    %94 = arith.mulf %89, %93 : vector<4x8x24xf32>
    %95 = arith.truncf %94 : vector<4x8x24xf32> to vector<4x8x24xbf16>
    "tpu.trace_start"() <{level = 10 : i32, message = "hqk,hkd->hqd"}> : () -> ()
    %cst_34 = arith.constant dense<0.000000e+00> : vector<4x8x32xf32>
    %96 = tpu.matmul %95, %83, %cst_34 {dimension_numbers = #tpu.dot_dimension_numbers<[2], [1], [1], [2], [0, 0, 0, 1, 1, 2], [0], [0]>} : vector<4x8x24xbf16>, vector<4x24x32xbf16>, vector<4x8x32xf32> -> vector<4x8x32xf32>
    "tpu.trace_stop"() : () -> ()
    %97 = tpu.transpose %96, [0, 2, 1] : vector<4x8x32xf32> -> vector<4x32x8xf32>
    %98 = vector.shape_cast %97 : vector<4x32x8xf32> to vector<128x8xf32>
    %99 = tpu.transpose %98, [1, 0] : vector<128x8xf32> -> vector<8x128xf32>
    %100 = vector.extract_strided_slice %62 {offsets = [8, 0], sizes = [8, 128], strides = [1, 1]} : vector<16x128xbf16> to vector<8x128xbf16>
    %101 = vector.extract_strided_slice %65 {offsets = [8, 0], sizes = [8, 256], strides = [1, 1]} : vector<16x256xbf16> to vector<8x256xbf16>
    %102 = vector.extract_strided_slice %68 {offsets = [16, 0], sizes = [16, 256], strides = [1, 1]} : vector<32x256xbf16> to vector<16x256xbf16>
    %103 = tpu.concatenate %101, %102 in 0 : vector<8x256xbf16>, vector<16x256xbf16> -> vector<24x256xbf16>
    %104 = tpu.transpose %100, [1, 0] : vector<8x128xbf16> -> vector<128x8xbf16>
    %105 = vector.shape_cast %104 : vector<128x8xbf16> to vector<4x32x8xbf16>
    %106 = tpu.transpose %105, [0, 2, 1] : vector<4x32x8xbf16> -> vector<4x8x32xbf16>
    %107 = vector.extract_strided_slice %103 {offsets = [0, 0], sizes = [24, 128], strides = [1, 1]} : vector<24x256xbf16> to vector<24x128xbf16>
    %108 = tpu.transpose %107, [1, 0] : vector<24x128xbf16> -> vector<128x24xbf16>
    %109 = vector.shape_cast %108 : vector<128x24xbf16> to vector<4x32x24xbf16>
    %110 = tpu.transpose %109, [0, 2, 1] : vector<4x32x24xbf16> -> vector<4x24x32xbf16>
    %111 = vector.extract_strided_slice %103 {offsets = [0, 128], sizes = [24, 128], strides = [1, 1]} : vector<24x256xbf16> to vector<24x128xbf16>
    %112 = tpu.transpose %111, [1, 0] : vector<24x128xbf16> -> vector<128x24xbf16>
    %113 = vector.shape_cast %112 : vector<128x24xbf16> to vector<4x32x24xbf16>
    %114 = tpu.transpose %113, [0, 2, 1] : vector<4x32x24xbf16> -> vector<4x24x32xbf16>
    "tpu.trace_start"() <{level = 10 : i32, message = "hqd,hkd->hqk"}> : () -> ()
    %cst_35 = arith.constant dense<0.000000e+00> : vector<4x8x24xf32>
    %115 = tpu.matmul %106, %110, %cst_35 {dimension_numbers = #tpu.dot_dimension_numbers<[2], [2], [1], [1], [0, 0, 0, 1, 1, 1], [0], [0]>} : vector<4x8x32xbf16>, vector<4x24x32xbf16>, vector<4x8x24xf32> -> vector<4x8x24xf32>
    "tpu.trace_stop"() : () -> ()
    %cst_36 = arith.constant dense<0xFF800000> : vector<4x8xf32>
    %116 = vector.multi_reduction <maximumf>, %115, %cst_36 [2] : vector<4x8x24xf32> to vector<4x8xf32>
    %117 = vector.shape_cast %116 : vector<4x8xf32> to vector<4x8x1xf32>
    %118 = vector.broadcast %117 : vector<4x8x1xf32> to vector<4x8x24xf32>
    %119 = arith.subf %115, %118 : vector<4x8x24xf32>
    %120 = math.exp %119 : vector<4x8x24xf32>
    %cst_37 = arith.constant dense<0.000000e+00> : vector<4x8xf32>
    %121 = vector.multi_reduction <add>, %120, %cst_37 [2] : vector<4x8x24xf32> to vector<4x8xf32>
    %122 = vector.shape_cast %121 : vector<4x8xf32> to vector<4x8x1xf32>
    %123 = tpu.reciprocal %122 {approx = true} : vector<4x8x1xf32> -> vector<4x8x1xf32>
    %124 = vector.broadcast %123 : vector<4x8x1xf32> to vector<4x8x24xf32>
    %125 = arith.mulf %120, %124 : vector<4x8x24xf32>
    %126 = arith.truncf %125 : vector<4x8x24xf32> to vector<4x8x24xbf16>
    "tpu.trace_start"() <{level = 10 : i32, message = "hqk,hkd->hqd"}> : () -> ()
    %cst_38 = arith.constant dense<0.000000e+00> : vector<4x8x32xf32>
    %127 = tpu.matmul %126, %114, %cst_38 {dimension_numbers = #tpu.dot_dimension_numbers<[2], [1], [1], [2], [0, 0, 0, 1, 1, 2], [0], [0]>} : vector<4x8x24xbf16>, vector<4x24x32xbf16>, vector<4x8x32xf32> -> vector<4x8x32xf32>
    "tpu.trace_stop"() : () -> ()
    %128 = tpu.transpose %127, [0, 2, 1] : vector<4x8x32xf32> -> vector<4x32x8xf32>
    %129 = vector.shape_cast %128 : vector<4x32x8xf32> to vector<128x8xf32>
    %130 = tpu.transpose %129, [1, 0] : vector<128x8xf32> -> vector<8x128xf32>
    %131 = tpu.concatenate %99, %130 in 0 : vector<8x128xf32>, vector<8x128xf32> -> vector<16x128xf32>
    %132 = arith.truncf %131 : vector<16x128xf32> to vector<16x128xbf16>
    %c0_39 = arith.constant 0 : index
    %c0_40 = arith.constant 0 : index
    %133 = vector.load %arg9[%c0_39, %c0_40] : memref<128x128xbf16, #tpu.memory_space<vmem>>, vector<128x128xbf16>
    %cst_41 = arith.constant dense<0.000000e+00> : vector<16x128xf32>
    %134 = tpu.matmul %132, %133, %cst_41 {dimension_numbers = #tpu.dot_dimension_numbers<[1], [0], [0], [1], [0, 0, 1, 1], [], []>} : vector<16x128xbf16>, vector<128x128xbf16>, vector<16x128xf32> -> vector<16x128xf32>
    %135 = vector.shape_cast %134 : vector<16x128xf32> to vector<2x8x128xf32>
    %c0_42 = arith.constant 0 : index
    %c0_43 = arith.constant 0 : index
    %c0_44 = arith.constant 0 : index
    %136 = vector.load %arg10[%c0_42, %c0_43, %c0_44] : memref<2x8x128xf32, #tpu.memory_space<vmem>>, vector<2x8x128xf32>
    tpu.vector_store %arg10[%c0_42, %c0_43, %c0_44], %135 {strides = array<i32>} : memref<2x8x128xf32, #tpu.memory_space<vmem>>, vector<2x8x128xf32>,
    return
  }
  func.func @transform_0(%arg0: i32) -> (i32, i32, i32) {
    %c0_i32 = arith.constant 0 : i32
    %c0_i32_0 = arith.constant 0 : i32
    %c0_i32_1 = arith.constant 0 : i32
    return %arg0, %c0_i32, %c0_i32_0 : i32, i32, i32
  }
  func.func @transform_1(%arg0: i32) -> (i32, i32, i32) {
    %c0_i32 = arith.constant 0 : i32
    %c0_i32_0 = arith.constant 0 : i32
    %c0_i32_1 = arith.constant 0 : i32
    return %arg0, %c0_i32, %c0_i32_0 : i32, i32, i32
  }
  func.func @transform_2(%arg0: i32) -> (i32, i32) {
    %c0_i32 = arith.constant 0 : i32
    %c0_i32_0 = arith.constant 0 : i32
    %c0_i32_1 = arith.constant 0 : i32
    return %c0_i32, %c0_i32_0 : i32, i32
  }
  func.func @transform_3(%arg0: i32) -> (i32, i32) {
    %c0_i32 = arith.constant 0 : i32
    %c0_i32_0 = arith.constant 0 : i32
    %c0_i32_1 = arith.constant 0 : i32
    return %c0_i32, %c0_i32_0 : i32, i32
  }
  func.func @transform_4(%arg0: i32) -> (i32, i32) {
    %c0_i32 = arith.constant 0 : i32
    %c0_i32_0 = arith.constant 0 : i32
    %c0_i32_1 = arith.constant 0 : i32
    return %c0_i32, %c0_i32_0 : i32, i32
  }
  func.func @transform_5(%arg0: i32) -> (i32, i32) {
    %c0_i32 = arith.constant 0 : i32
    %c0_i32_0 = arith.constant 0 : i32
    %c0_i32_1 = arith.constant 0 : i32
    return %c0_i32, %c0_i32_0 : i32, i32
  }
  func.func @transform_6(%arg0: i32) -> (i32, i32) {
    %c0_i32 = arith.constant 0 : i32
    %c0_i32_0 = arith.constant 0 : i32
    %c0_i32_1 = arith.constant 0 : i32
    return %c0_i32, %c0_i32_0 : i32, i32
  }
  func.func @transform_7(%arg0: i32) -> (i32, i32) {
    %c0_i32 = arith.constant 0 : i32
    %c0_i32_0 = arith.constant 0 : i32
    %c0_i32_1 = arith.constant 0 : i32
    return %c0_i32, %c0_i32_0 : i32, i32
  }
  func.func @transform_8(%arg0: i32) -> (i32, i32) {
    %c0_i32 = arith.constant 0 : i32
    %c0_i32_0 = arith.constant 0 : i32
    %c0_i32_1 = arith.constant 0 : i32
    return %c0_i32, %c0_i32_0 : i32, i32
  }
  func.func @transform_9(%arg0: i32) -> (i32, i32, i32) {
    %c0_i32 = arith.constant 0 : i32
    %c0_i32_0 = arith.constant 0 : i32
    %c0_i32_1 = arith.constant 0 : i32
    return %arg0, %c0_i32, %c0_i32_0 : i32, i32, i32
  }
}

</mosaic_0001>

<llo_original>
// kernel: tpu_custom_call.1
$region0: #{tpu_custom_call.1}
  #allocation0 [shape = 'u32[]', space=smem, size = 0x4, offset = 0x4, fixed_abs, tag = 'smem constant byte address 0x4 - core index']
  #allocation1 [shape = 'u32[72,128]{1,0:T(1,128)}', space=vmem, size = 0x9000, scoped, tag = 'internal scratch']
  %s0 = inlined_call_operand.hbm [shape: bf16[4,16,128], index: 0, kind: input, shape index: {}]
  %s1 = inlined_call_operand.hbm [shape: bf16[4,8,128], index: 1, kind: input, shape index: {}]
  %s2 = inlined_call_operand.vmem [shape: f32[1,128], index: 2, kind: input, shape index: {}]
  %s3 = inlined_call_operand.vmem [shape: f32[1,128], index: 3, kind: input, shape index: {}]
  %s4 = inlined_call_operand.vmem [shape: f32[1,128], index: 4, kind: input, shape index: {}]
  %s5 = inlined_call_operand.vmem [shape: f32[1,128], index: 5, kind: input, shape index: {}]
  %s6 = inlined_call_operand.hbm [shape: bf16[128,128], index: 6, kind: input, shape index: {}]
  %s7 = inlined_call_operand.hbm [shape: bf16[128,256], index: 7, kind: input, shape index: {}]
  %s8 = inlined_call_operand.hbm [shape: bf16[128,128], index: 8, kind: input, shape index: {}]
  %s9 = inlined_call_operand.hbm [shape: f32[4,8,128], index: 9, kind: output, shape index: {}]
  %s10 = sld [smem:[#allocation0]]
  $region89: #{tpu_custom_call.1} parent=0
    _
  %s12 = ssub.s32 1, %s10
  %s13 = scalar_select 0, %s12, %s10
  $region1: #{tpu_custom_call.1} parent=0
    #allocation2 [shape = 'u8[16384]{0}', space=vmem, size = 0x4000, scoped, tag = 'input window, operand 0']
    #allocation3 [shape = 's32[2]{0}', space=sflag, size = 0x8, scoped, tag = 'scoped memory for tpu_custom_call.1']
    #allocation4 [shape = 's32[2]{0}', space=sflag, size = 0x8, scoped, tag = 'scoped memory for tpu_custom_call.1']
    #allocation5 [shape = 'u8[8192]{0}', space=vmem, size = 0x2000, scoped, tag = 'input window, operand 1']
    #allocation6 [shape = 's32[2]{0}', space=sflag, size = 0x8, scoped, tag = 'scoped memory for tpu_custom_call.1']
    #allocation7 [shape = 'u8[32768]{0}', space=vmem, size = 0x8000, scoped, tag = 'input window, operand 6, single buffered']
    #allocation8 [shape = 'u8[65536]{0}', space=vmem, size = 0x10000, scoped, tag = 'input window, operand 7, single buffered']
    #allocation9 [shape = 's32[1]{0}', space=sflag, size = 0x4, scoped, tag = 'scoped memory for tpu_custom_call.1']
    #allocation10 [shape = 'u8[32768]{0}', space=vmem, size = 0x8000, scoped, tag = 'input window, operand 8, single buffered']
    #allocation11 [shape = 'u8[16384]{0}', space=vmem, size = 0x4000, scoped, tag = 'output window, operand 0']
    %14 = vsyncpa [#allocation3], 0
    %s15 = scalar_lea.sflag [#allocation3], 1
    %16 = vsyncpa %s15, 0
    %17 = vsyncpa [#allocation6], 0
    %s18 = scalar_lea.sflag [#allocation6], 1
    %19 = vsyncpa %s18, 0
    %20 = vsyncpa [#allocation9], 0
    %21 = vsyncpa [#allocation4], 0
    %s22 = scalar_lea.sflag [#allocation4], 1
    %23 = vsyncpa %s22, 0
    loop: start=0, step=1, limit=4
    $region2: #{tpu_custom_call.1} parent=1 // loop_pre_header
      _
    $region3: #{tpu_custom_call.1} parent=1 // loop_header
      %s25 = sphi 0, %s29
      %p26 = scmp.ge.s32.totalorder %s25, 4
      %s35 = sphi 0, %s37
      %s38 = sphi 0, %s35
      %s39 = sphi 0, %s38
      %s55 = sphi 0, %s39
      %s61 = sphi 0, %s63
      %s64 = sphi 0, %s61
      %s65 = sphi 0, %s64
      %s81 = sphi 0, %s65
      %s85 = sphi 0, %s85
      %s87 = sphi 0, %s85
      %s88 = sphi 0, %s87
      %s102 = sphi 0, %s88
      %s106 = sphi 0, %s106
      %s108 = sphi 0, %s106
      %s109 = sphi 0, %s108
      %s123 = sphi 0, %s109
      %s127 = sphi 0, %s127
      %s129 = sphi 0, %s127
      %s130 = sphi 0, %s129
      %s144 = sphi 0, %s130
      %s148 = sphi 0, %s148
      %s150 = sphi 0, %s148
      %s151 = sphi 0, %s150
      %s165 = sphi 0, %s151
      %s169 = sphi 0, %s169
      %s171 = sphi 0, %s169
      %s172 = sphi 0, %s171
      %s186 = sphi 0, %s172
      %s190 = sphi 0, %s190
      %s192 = sphi 0, %s190
      %s193 = sphi 0, %s192
      %s207 = sphi 0, %s193
      %s211 = sphi 0, %s211
      %s213 = sphi 0, %s211
      %s214 = sphi 0, %s213
      %s228 = sphi 0, %s214
      %s234 = sphi 0, %s236
      %s237 = sphi 0, %s234
      %s238 = sphi 0, %s237
      %s254 = sphi 0, %s238
    $region4: #{tpu_custom_call.1} parent=1 // loop_header_branch
      %28 = sbr.rel (%p26) target = $region8
    $region5: #{tpu_custom_call.1} parent=1 // loop_body
      %s30 = ssub.s32 %s25, 1
      %s31 = ssub.s32 %s25, 2
      %s32 = sadd.s32 %s25, 1
      %s33 = ssub.s32 %s25, %s32
      %p34 = scmp.eq.s32.totalorder %s33, 0
      %s36 = sadd.s32 %s35, 1
      %s37 = scalar_select %p34, %s35, %s36
      %p40 = pneg %p34
      %p41 = scmp.eq.s32.totalorder %s25, 1
      %p42 = por %p40, %p41
      %p43 = scmp.ne.s32.totalorder %s35, %s38
      %p44 = scmp.eq.s32.totalorder %s25, 0
      %p45 = por %p43, %p44
      %p46 = scmp.ne.s32.totalorder %s35, %s38
      %p47 = scmp.eq.s32.totalorder %s30, 1
      %p48 = por %p46, %p47
      %p49 = scmp.ne.s32.totalorder %s38, %s39
      %p50 = scmp.eq.s32.totalorder %s30, 0
      %p51 = por %p49, %p50
      %p52 = scmp.ne.s32.totalorder %s38, %s39
      %p53 = scmp.eq.s32.totalorder %s31, 1
      %p54 = por %p52, %p53
      %p56 = scmp.ne.s32.totalorder %s39, %s55
      %p57 = scmp.eq.s32.totalorder %s31, 0
      %p58 = por %p56, %p57
      %s59 = ssub.s32 %s25, %s32
      %p60 = scmp.eq.s32.totalorder %s59, 0
      %s62 = sadd.s32 %s61, 1
      %s63 = scalar_select %p60, %s61, %s62
      %p66 = pneg %p60
      %p67 = scmp.eq.s32.totalorder %s25, 1
      %p68 = por %p66, %p67
      %p69 = scmp.ne.s32.totalorder %s61, %s64
      %p70 = scmp.eq.s32.totalorder %s25, 0
      %p71 = por %p69, %p70
      %p72 = scmp.ne.s32.totalorder %s61, %s64
      %p73 = scmp.eq.s32.totalorder %s30, 1
      %p74 = por %p72, %p73
      %p75 = scmp.ne.s32.totalorder %s64, %s65
      %p76 = scmp.eq.s32.totalorder %s30, 0
      %p77 = por %p75, %p76
      %p78 = scmp.ne.s32.totalorder %s64, %s65
      %p79 = scmp.eq.s32.totalorder %s31, 1
      %p80 = por %p78, %p79
      %p82 = scmp.ne.s32.totalorder %s65, %s81
      %p83 = scmp.eq.s32.totalorder %s31, 0
      %p84 = por %p82, %p83
      %s86 = sadd.s32 %s85, 1
      %p89 = scmp.eq.s32.totalorder %s25, 1
      %p90 = scmp.ne.s32.totalorder %s85, %s87
      %p91 = scmp.eq.s32.totalorder %s25, 0
      %p92 = por %p90, %p91
      %p93 = scmp.ne.s32.totalorder %s85, %s87
      %p94 = scmp.eq.s32.totalorder %s30, 1
      %p95 = por %p93, %p94
      %p96 = scmp.ne.s32.totalorder %s87, %s88
      %p97 = scmp.eq.s32.totalorder %s30, 0
      %p98 = por %p96, %p97
      %p99 = scmp.ne.s32.totalorder %s87, %s88
      %p100 = scmp.eq.s32.totalorder %s31, 1
      %p101 = por %p99, %p100
      %p103 = scmp.ne.s32.totalorder %s88, %s102
      %p104 = scmp.eq.s32.totalorder %s31, 0
      %p105 = por %p103, %p104
      %s107 = sadd.s32 %s106, 1
      %p110 = scmp.eq.s32.totalorder %s25, 1
      %p111 = scmp.ne.s32.totalorder %s106, %s108
      %p112 = scmp.eq.s32.totalorder %s25, 0
      %p113 = por %p111, %p112
      %p114 = scmp.ne.s32.totalorder %s106, %s108
      %p115 = scmp.eq.s32.totalorder %s30, 1
      %p116 = por %p114, %p115
      %p117 = scmp.ne.s32.totalorder %s108, %s109
      %p118 = scmp.eq.s32.totalorder %s30, 0
      %p119 = por %p117, %p118
      %p120 = scmp.ne.s32.totalorder %s108, %s109
      %p121 = scmp.eq.s32.totalorder %s31, 1
      %p122 = por %p120, %p121
      %p124 = scmp.ne.s32.totalorder %s109, %s123
      %p125 = scmp.eq.s32.totalorder %s31, 0
      %p126 = por %p124, %p125
      %s128 = sadd.s32 %s127, 1
      %p131 = scmp.eq.s32.totalorder %s25, 1
      %p132 = scmp.ne.s32.totalorder %s127, %s129
      %p133 = scmp.eq.s32.totalorder %s25, 0
      %p134 = por %p132, %p133
      %p135 = scmp.ne.s32.totalorder %s127, %s129
      %p136 = scmp.eq.s32.totalorder %s30, 1
      %p137 = por %p135, %p136
      %p138 = scmp.ne.s32.totalorder %s129, %s130
      %p139 = scmp.eq.s32.totalorder %s30, 0
      %p140 = por %p138, %p139
      %p141 = scmp.ne.s32.totalorder %s129, %s130
      %p142 = scmp.eq.s32.totalorder %s31, 1
      %p143 = por %p141, %p142
      %p145 = scmp.ne.s32.totalorder %s130, %s144
      %p146 = scmp.eq.s32.totalorder %s31, 0
      %p147 = por %p145, %p146
      %s149 = sadd.s32 %s148, 1
      %p152 = scmp.eq.s32.totalorder %s25, 1
      %p153 = scmp.ne.s32.totalorder %s148, %s150
      %p154 = scmp.eq.s32.totalorder %s25, 0
      %p155 = por %p153, %p154
      %p156 = scmp.ne.s32.totalorder %s148, %s150
      %p157 = scmp.eq.s32.totalorder %s30, 1
      %p158 = por %p156, %p157
      %p159 = scmp.ne.s32.totalorder %s150, %s151
      %p160 = scmp.eq.s32.totalorder %s30, 0
      %p161 = por %p159, %p160
      %p162 = scmp.ne.s32.totalorder %s150, %s151
      %p163 = scmp.eq.s32.totalorder %s31, 1
      %p164 = por %p162, %p163
      %p166 = scmp.ne.s32.totalorder %s151, %s165
      %p167 = scmp.eq.s32.totalorder %s31, 0
      %p168 = por %p166, %p167
      %s170 = sadd.s32 %s169, 1
      %p173 = scmp.eq.s32.totalorder %s25, 1
      %p174 = scmp.ne.s32.totalorder %s169, %s171
      %p175 = scmp.eq.s32.totalorder %s25, 0
      %p176 = por %p174, %p175
      %p177 = scmp.ne.s32.totalorder %s169, %s171
      %p178 = scmp.eq.s32.totalorder %s30, 1
      %p179 = por %p177, %p178
      %p180 = scmp.ne.s32.totalorder %s171, %s172
      %p181 = scmp.eq.s32.totalorder %s30, 0
      %p182 = por %p180, %p181
      %p183 = scmp.ne.s32.totalorder %s171, %s172
      %p184 = scmp.eq.s32.totalorder %s31, 1
      %p185 = por %p183, %p184
      %p187 = scmp.ne.s32.totalorder %s172, %s186
      %p188 = scmp.eq.s32.totalorder %s31, 0
      %p189 = por %p187, %p188
      %s191 = sadd.s32 %s190, 1
      %p194 = scmp.eq.s32.totalorder %s25, 1
      %p195 = scmp.ne.s32.totalorder %s190, %s192
      %p196 = scmp.eq.s32.totalorder %s25, 0
      %p197 = por %p195, %p196
      %p198 = scmp.ne.s32.totalorder %s190, %s192
      %p199 = scmp.eq.s32.totalorder %s30, 1
      %p200 = por %p198, %p199
      %p201 = scmp.ne.s32.totalorder %s192, %s193
      %p202 = scmp.eq.s32.totalorder %s30, 0
      %p203 = por %p201, %p202
      %p204 = scmp.ne.s32.totalorder %s192, %s193
      %p205 = scmp.eq.s32.totalorder %s31, 1
      %p206 = por %p204, %p205
      %p208 = scmp.ne.s32.totalorder %s193, %s207
      %p209 = scmp.eq.s32.totalorder %s31, 0
      %p210 = por %p208, %p209
      %s212 = sadd.s32 %s211, 1
      %p215 = scmp.eq.s32.totalorder %s25, 1
      %p216 = scmp.ne.s32.totalorder %s211, %s213
      %p217 = scmp.eq.s32.totalorder %s25, 0
      %p218 = por %p216, %p217
      %p219 = scmp.ne.s32.totalorder %s211, %s213
      %p220 = scmp.eq.s32.totalorder %s30, 1
      %p221 = por %p219, %p220
      %p222 = scmp.ne.s32.totalorder %s213, %s214
      %p223 = scmp.eq.s32.totalorder %s30, 0
      %p224 = por %p222, %p223
      %p225 = scmp.ne.s32.totalorder %s213, %s214
      %p226 = scmp.eq.s32.totalorder %s31, 1
      %p227 = por %p225, %p226
      %p229 = scmp.ne.s32.totalorder %s214, %s228
      %p230 = scmp.eq.s32.totalorder %s31, 0
      %p231 = por %p229, %p230
      %s232 = ssub.s32 %s25, %s32
      %p233 = scmp.eq.s32.totalorder %s232, 0
      %s235 = sadd.s32 %s234, 1
      %s236 = scalar_select %p233, %s234, %s235
      %p239 = pneg %p233
      %p240 = scmp.eq.s32.totalorder %s25, 1
      %p241 = por %p239, %p240
      %p242 = scmp.ne.s32.totalorder %s234, %s237
      %p243 = scmp.eq.s32.totalorder %s25, 0
      %p244 = por %p242, %p243
      %p245 = scmp.ne.s32.totalorder %s234, %s237
      %p246 = scmp.eq.s32.totalorder %s30, 1
      %p247 = por %p245, %p246
      %p248 = scmp.ne.s32.totalorder %s237, %s238
      %p249 = scmp.eq.s32.totalorder %s30, 0
      %p250 = por %p248, %p249
      %p251 = scmp.ne.s32.totalorder %s237, %s238
      %p252 = scmp.eq.s32.totalorder %s31, 1
      %p253 = por %p251, %p252
      %p255 = scmp.ne.s32.totalorder %s238, %s254
      %p256 = scmp.eq.s32.totalorder %s31, 0
      %p257 = por %p255, %p256
      %p258 = scmp.le.s32.totalorder 1, %s25
      %p259 = scmp.lt.s32.totalorder %s25, 3
      %p260 = pnand %p258, %p259
      %p261 = pneg %p260
      // Predicated region
      $region9: #{tpu_custom_call.1} parent=5 // pred_check
        _
      $region10: #{tpu_custom_call.1} parent=5 // pred_check_branch
        %263 = sbr.rel (%p260) target = $region12
      $region11: #{tpu_custom_call.1} parent=5 // pred_region
        %s264 = ssub.s32 %s25, 1
        // Predicated region
        $region13: #{tpu_custom_call.1} parent=11 // pred_check
          %p265 = pneg %p98
        $region14: #{tpu_custom_call.1} parent=11 // pred_check_branch
          %267 = sbr.rel (%p265) target = $region16
        $region15: #{tpu_custom_call.1} parent=11 // pred_region
          _
        $region16: #{tpu_custom_call.1} parent=11 // pred_fallthru
          _
        // Predicated region
        $region17: #{tpu_custom_call.1} parent=11 // pred_check
          %p268 = pneg %p119
        $region18: #{tpu_custom_call.1} parent=11 // pred_check_branch
          %270 = sbr.rel (%p268) target = $region20
        $region19: #{tpu_custom_call.1} parent=11 // pred_region
          _
        $region20: #{tpu_custom_call.1} parent=11 // pred_fallthru
          _
        // Predicated region
        $region21: #{tpu_custom_call.1} parent=11 // pred_check
          %p271 = pneg %p140
        $region22: #{tpu_custom_call.1} parent=11 // pred_check_branch
          %273 = sbr.rel (%p271) target = $region24
        $region23: #{tpu_custom_call.1} parent=11 // pred_region
          _
        $region24: #{tpu_custom_call.1} parent=11 // pred_fallthru
          _
        // Predicated region
        $region25: #{tpu_custom_call.1} parent=11 // pred_check
          %p274 = pneg %p161
        $region26: #{tpu_custom_call.1} parent=11 // pred_check_branch
          %276 = sbr.rel (%p274) target = $region28
        $region27: #{tpu_custom_call.1} parent=11 // pred_region
          _
        $region28: #{tpu_custom_call.1} parent=11 // pred_fallthru
          _
        // Predicated region
        $region29: #{tpu_custom_call.1} parent=11 // pred_check
          %p277 = pneg %p182
        $region30: #{tpu_custom_call.1} parent=11 // pred_check_branch
          %279 = sbr.rel (%p277) target = $region32
        $region31: #{tpu_custom_call.1} parent=11 // pred_region
          %281 = vsyncadd [#allocation6], 0
          %s282 = sshll.u32 %s6, 4
          %s283 = int_to_ptr.hbm [resolvable:$true] %s282
          %s284 = sshll.u32 [#allocation7], 4
          %s285 = int_to_ptr.vmem [resolvable:$true] %s284
          %290 = dma.hbm_to_vmem [thread:$0]  %s283, 1024, %s285, [#allocation6], 64, 64, 4
        $region32: #{tpu_custom_call.1} parent=11 // pred_fallthru
          _
        // Predicated region
        $region33: #{tpu_custom_call.1} parent=11 // pred_check
          %p291 = pneg %p203
        $region34: #{tpu_custom_call.1} parent=11 // pred_check_branch
          %293 = sbr.rel (%p291) target = $region36
        $region35: #{tpu_custom_call.1} parent=11 // pred_region
          %295 = vsyncadd [#allocation9], 0
          %s296 = sshll.u32 %s7, 4
          %s297 = int_to_ptr.hbm [resolvable:$true] %s296
          %s298 = sshll.u32 [#allocation8], 4
          %s299 = int_to_ptr.vmem [resolvable:$true] %s298
          %304 = dma.hbm_to_vmem [thread:$0]  %s297, 2048, %s299, [#allocation9], 128, 128, 8
        $region36: #{tpu_custom_call.1} parent=11 // pred_fallthru
          _
        // Predicated region
        $region37: #{tpu_custom_call.1} parent=11 // pred_check
          %p305 = pneg %p224
        $region38: #{tpu_custom_call.1} parent=11 // pred_check_branch
          %307 = sbr.rel (%p305) target = $region40
        $region39: #{tpu_custom_call.1} parent=11 // pred_region
          %309 = vsyncadd [#allocation9], 0
          %s310 = sshll.u32 %s8, 4
          %s311 = int_to_ptr.hbm [resolvable:$true] %s310
          %s312 = sshll.u32 [#allocation10], 4
          %s313 = int_to_ptr.vmem [resolvable:$true] %s312
          %318 = dma.hbm_to_vmem [thread:$0]  %s311, 1024, %s313, [#allocation9], 64, 64, 4
        $region40: #{tpu_custom_call.1} parent=11 // pred_fallthru
          _
      $region12: #{tpu_custom_call.1} parent=5 // pred_fallthru
        _
      %p319 = scmp.lt.s32.totalorder %s25, 2
      // Predicated region
      $region41: #{tpu_custom_call.1} parent=5 // pred_check
        %p320 = pneg %p319
      $region42: #{tpu_custom_call.1} parent=5 // pred_check_branch
        %322 = sbr.rel (%p320) target = $region44
      $region43: #{tpu_custom_call.1} parent=5 // pred_region
        // Predicated region
        $region45: #{tpu_custom_call.1} parent=43 // pred_check
          %p323 = pneg %p45
        $region46: #{tpu_custom_call.1} parent=43 // pred_check_branch
          %325 = sbr.rel (%p323) target = $region48
        $region47: #{tpu_custom_call.1} parent=43 // pred_region
          %s326 = sand.u32 %s35, 1
          %s327 = scalar_lea.sflag [#allocation3], %s326
          %s328 = sand.u32 %s35, 1
          %s329 = smul.addr %s328, 16
          %s330 = scalar_lea.vmem [#allocation2], %s329
          %s331 = smul.u32 2, %s25
          %333 = vsyncadd %s327, 0
          %s334 = smul.addr %s331, 2
          %s335 = smul.addr %s334, 4
          %s336 = scalar_lea.hbm %s0, %s335
          %s337 = sshll.u32 %s336, 4
          %s338 = int_to_ptr.hbm [resolvable:$true] %s337
          %s339 = sshll.u32 %s330, 4
          %s340 = int_to_ptr.vmem [resolvable:$true] %s339
          %345 = dma.hbm_to_vmem [thread:$0]  %s338, 256, %s340, %s327, 64, 64, 4
        $region48: #{tpu_custom_call.1} parent=43 // pred_fallthru
          _
        // Predicated region
        $region49: #{tpu_custom_call.1} parent=43 // pred_check
          %p346 = pneg %p71
        $region50: #{tpu_custom_call.1} parent=43 // pred_check_branch
          %348 = sbr.rel (%p346) target = $region52
        $region51: #{tpu_custom_call.1} parent=43 // pred_region
          %s349 = sand.u32 %s25, 1
          %s350 = scalar_lea.sflag [#allocation6], %s349
          %s351 = sand.u32 %s61, 1
          %s352 = smul.addr %s351, 8
          %s353 = scalar_lea.vmem [#allocation5], %s352
          %s354 = smul.u32 2, %s25
          %356 = vsyncadd %s350, 0
          %s357 = smul.addr %s354, 4
          %s358 = scalar_lea.hbm %s1, %s357
          %s359 = sshll.u32 %s358, 4
          %s360 = int_to_ptr.hbm [resolvable:$true] %s359
          %s361 = sshll.u32 %s353, 4
          %s362 = int_to_ptr.vmem [resolvable:$true] %s361
          %367 = dma.hbm_to_vmem [thread:$0]  %s360, 128, %s362, %s350, 64, 64, 4
        $region52: #{tpu_custom_call.1} parent=43 // pred_fallthru
          _
      $region44: #{tpu_custom_call.1} parent=5 // pred_fallthru
        _
      %p368 = scmp.le.s32.totalorder 1, %s25
      %p369 = scmp.lt.s32.totalorder %s25, 3
      %p370 = pnand %p368, %p369
      %p371 = pneg %p370
      // Predicated region
      $region53: #{tpu_custom_call.1} parent=5 // pred_check
        _
      $region54: #{tpu_custom_call.1} parent=5 // pred_check_branch
        %373 = sbr.rel (%p370) target = $region56
      $region55: #{tpu_custom_call.1} parent=5 // pred_region
        %s374 = ssub.s32 %s25, 1
        %s375 = sand.u32 %s38, 1
        %s376 = scalar_lea.sflag [#allocation3], %s375
        %s377 = sand.u32 %s38, 1
        %s378 = smul.addr %s377, 16
        %s379 = scalar_lea.vmem [#allocation2], %s378
        // Predicated region
        $region57: #{tpu_custom_call.1} parent=55 // pred_check
          %p380 = pneg %p51
        $region58: #{tpu_custom_call.1} parent=55 // pred_check_branch
          %382 = sbr.rel (%p380) target = $region60
        $region59: #{tpu_custom_call.1} parent=55 // pred_region
          %384 = dma.done %s376, 256
        $region60: #{tpu_custom_call.1} parent=55 // pred_fallthru
          _
        %s385 = sand.u32 %s30, 1
        %s386 = scalar_lea.sflag [#allocation6], %s385
        %s387 = sand.u32 %s64, 1
        %s388 = smul.addr %s387, 8
        %s389 = scalar_lea.vmem [#allocation5], %s388
        // Predicated region
        $region61: #{tpu_custom_call.1} parent=55 // pred_check
          %p390 = pneg %p77
        $region62: #{tpu_custom_call.1} parent=55 // pred_check_branch
          %392 = sbr.rel (%p390) target = $region64
        $region63: #{tpu_custom_call.1} parent=55 // pred_region
          %394 = dma.done %s386, 128
        $region64: #{tpu_custom_call.1} parent=55 // pred_fallthru
          _
        // Predicated region
        $region65: #{tpu_custom_call.1} parent=55 // pred_check
          %p395 = pneg %p182
        $region66: #{tpu_custom_call.1} parent=55 // pred_check_branch
          %397 = sbr.rel (%p395) target = $region68
        $region67: #{tpu_custom_call.1} parent=55 // pred_region
          %399 = dma.done [#allocation6], 1024
        $region68: #{tpu_custom_call.1} parent=55 // pred_fallthru
          _
        // Predicated region
        $region69: #{tpu_custom_call.1} parent=55 // pred_check
          %p400 = pneg %p203
        $region70: #{tpu_custom_call.1} parent=55 // pred_check_branch
          %402 = sbr.rel (%p400) target = $region72
        $region71: #{tpu_custom_call.1} parent=55 // pred_region
          %404 = dma.done [#allocation9], 2048
        $region72: #{tpu_custom_call.1} parent=55 // pred_fallthru
          _
        // Predicated region
        $region73: #{tpu_custom_call.1} parent=55 // pred_check
          %p405 = pneg %p224
        $region74: #{tpu_custom_call.1} parent=55 // pred_check_branch
          %407 = sbr.rel (%p405) target = $region76
        $region75: #{tpu_custom_call.1} parent=55 // pred_region
          %409 = dma.done [#allocation9], 1024
        $region76: #{tpu_custom_call.1} parent=55 // pred_fallthru
          _
        %s410 = sand.u32 %s38, 1
        %s411 = scalar_lea.sflag [#allocation3], %s410
        %s412 = sand.u32 %s38, 1
        %s413 = smul.addr %s412, 16
        %s414 = scalar_lea.vmem [#allocation2], %s413
        %p415 = pneg %p51
        %p416 = pneg %p48
        %s417 = sand.u32 %s30, 1
        %s418 = scalar_lea.sflag [#allocation6], %s417
        %s419 = sand.u32 %s64, 1
        %s420 = smul.addr %s419, 8
        %s421 = scalar_lea.vmem [#allocation5], %s420
        %p422 = pneg %p77
        %p423 = pneg %p74
        %p424 = pneg %p98
        %p425 = pneg %p95
        %p426 = pneg %p119
        %p427 = pneg %p116
        %p428 = pneg %p140
        %p429 = pneg %p137
        %p430 = pneg %p161
        %p431 = pneg %p158
        %p432 = pneg %p182
        %p433 = pneg %p179
        %p434 = pneg %p203
        %p435 = pneg %p200
        %p436 = pneg %p224
        %p437 = pneg %p221
        %p438 = pneg %p250
        %p439 = pneg %p247
        %s440 = sand.u32 %s237, 1
        %s441 = scalar_lea.sflag [#allocation4], %s440
        %s442 = sand.u32 %s237, 1
        %s443 = smul.addr %s442, 16
        %s444 = scalar_lea.vmem [#allocation11], %s443
        %s445 = smul.u32 2, %s30
        %s446 = smul.u32 2, %s30
        %s447 = smul.u32 2, %s30
        %v449 = vld [vmem:[%s379] sm:$0xf]
        %v450 = vld [vmem:[%s379 + $0x4] sm:$0xf]
        %v451 = vld [vmem:[%s379 + $0x8] sm:$0xf]
        %v452 = vld [vmem:[%s379 + $0xc] sm:$0xf]
        %v453 = vunpack.c.l.bf16 %v449
        %v454 = vunpack.c.l.bf16 %v450
        %v455 = vunpack.c.l.bf16 %v451
        %v456 = vunpack.c.l.bf16 %v452
        %v457 = vld [vmem:[%s389] sm:$0xf]
        %v458 = vld [vmem:[%s389 + $0x4] sm:$0xf]
        %v459 = vunpack.c.l.bf16 %v457
        %v460 = vunpack.c.l.bf16 %v458
        %v461 = vld [vmem:[%s2] sm:$0x1]
        %v462 = vld [vmem:[%s3] sm:$0x1]
        %463 = vadd.xlane.f32.xlu0 %v453
        %v464 = vpop.xlane.xlu0 %463
        %465 = vadd.xlane.f32.xlu0 %v454
        %v466 = vpop.xlane.xlu0 %465
        %467 = vadd.xlane.f32.xlu0 %v455
        %v468 = vpop.xlane.xlu0 %467
        %469 = vadd.xlane.f32.xlu0 %v456
        %v470 = vpop.xlane.xlu0 %469
        %v471 = vrcp.pop 128.0
        %v472 = vmul.f32 128.0, %v471
        %v473 = vsub.f32 1.0, %v472
        %v474 = vmul.f32 %v471, %v473
        %v475 = vadd.f32 %v471, %v474
        %vm476 = vweird.f32 %v471
        %v477 = vsel %vm476, %v471, %v475
        %v478 = vmul.f32 %v464, %v477
        %v479 = vmul.f32 %v466, %v477
        %v480 = vmul.f32 %v468, %v477
        %v481 = vmul.f32 %v470, %v477
        %v482 = vsub.f32 %v453, %v478
        %v483 = vsub.f32 %v454, %v479
        %v484 = vsub.f32 %v455, %v480
        %v485 = vsub.f32 %v456, %v481
        %v486 = vmul.f32 %v482, %v482
        %v487 = vmul.f32 %v483, %v483
        %v488 = vmul.f32 %v484, %v484
        %v489 = vmul.f32 %v485, %v485
        %490 = vadd.xlane.f32.xlu0 %v486
        %v491 = vpop.xlane.xlu0 %490
        %492 = vadd.xlane.f32.xlu0 %v487
        %v493 = vpop.xlane.xlu0 %492
        %494 = vadd.xlane.f32.xlu0 %v488
        %v495 = vpop.xlane.xlu0 %494
        %496 = vadd.xlane.f32.xlu0 %v489
        %v497 = vpop.xlane.xlu0 %496
        %v498 = vmul.f32 %v491, %v477
        %v499 = vmul.f32 %v493, %v477
        %v500 = vmul.f32 %v495, %v477
        %v501 = vmul.f32 %v497, %v477
        %v502 = vadd.f32 %v498, 1e-05
        %v503 = vadd.f32 %v499, 1e-05
        %v504 = vadd.f32 %v500, 1e-05
        %v505 = vadd.f32 %v501, 1e-05
        %v506 = vrsqrt.pop %v502
        %v507 = vmul.f32 %v506, %v502
        %v508 = vmul.f32 %v507, %v506
        %v509 = vmul.f32 0.5, %v508
        %v510 = vsub.f32 1.5, %v509
        %v511 = vmul.f32 %v506, %v510
        %vm512 = vweird.f32 %v502
        %vm513 = vweird.f32 %v506
        %vm514 = vmor %vm512, %vm513
        %v515 = vsel %vm514, %v506, %v511
        %v516 = vrsqrt.pop %v503
        %v517 = vmul.f32 %v516, %v503
        %v518 = vmul.f32 %v517, %v516
        %v519 = vmul.f32 0.5, %v518
        %v520 = vsub.f32 1.5, %v519
        %v521 = vmul.f32 %v516, %v520
        %vm522 = vweird.f32 %v503
        %vm523 = vweird.f32 %v516
        %vm524 = vmor %vm522, %vm523
        %v525 = vsel %vm524, %v516, %v521
        %v526 = vrsqrt.pop %v504
        %v527 = vmul.f32 %v526, %v504
        %v528 = vmul.f32 %v527, %v526
        %v529 = vmul.f32 0.5, %v528
        %v530 = vsub.f32 1.5, %v529
        %v531 = vmul.f32 %v526, %v530
        %vm532 = vweird.f32 %v504
        %vm533 = vweird.f32 %v526
        %vm534 = vmor %vm532, %vm533
        %v535 = vsel %vm534, %v526, %v531
        %v536 = vrsqrt.pop %v505
        %v537 = vmul.f32 %v536, %v505
        %v538 = vmul.f32 %v537, %v536
        %v539 = vmul.f32 0.5, %v538
        %v540 = vsub.f32 1.5, %v539
        %v541 = vmul.f32 %v536, %v540
        %vm542 = vweird.f32 %v505
        %vm543 = vweird.f32 %v536
        %vm544 = vmor %vm542, %vm543
        %v545 = vsel %vm544, %v536, %v541
        %v546 = vmul.f32 %v482, %v515
        %v547 = vmul.f32 %v483, %v525
        %v548 = vmul.f32 %v484, %v535
        %v549 = vmul.f32 %v485, %v545
        %v551 = vperm.slane %v461, 0
        %v553 = vmul.f32 %v546, %v551
        %v554 = vmul.f32 %v547, %v551
        %v555 = vmul.f32 %v548, %v551
        %v556 = vmul.f32 %v549, %v551
        %v558 = vperm.slane %v462, 0
        %v560 = vadd.f32 %v553, %v558
        %v561 = vadd.f32 %v554, %v558
        %v562 = vadd.f32 %v555, %v558
        %v563 = vadd.f32 %v556, %v558
        %v564 = vpack.c.bf16 %v561, %v560
        %v565 = vpack.c.bf16 %v563, %v562
        %v566 = vld [vmem:[%s4] sm:$0x1]
        %v567 = vld [vmem:[%s5] sm:$0x1]
        %568 = vadd.xlane.f32.xlu0 %v459
        %v569 = vpop.xlane.xlu0 %568
        %570 = vadd.xlane.f32.xlu0 %v460
        %v571 = vpop.xlane.xlu0 %570
        %v572 = vmul.f32 %v569, %v477
        %v573 = vmul.f32 %v571, %v477
        %v574 = vsub.f32 %v459, %v572
        %v575 = vsub.f32 %v460, %v573
        %v576 = vmul.f32 %v574, %v574
        %v577 = vmul.f32 %v575, %v575
        %578 = vadd.xlane.f32.xlu0 %v576
        %v579 = vpop.xlane.xlu0 %578
        %580 = vadd.xlane.f32.xlu0 %v577
        %v581 = vpop.xlane.xlu0 %580
        %v582 = vmul.f32 %v579, %v477
        %v583 = vmul.f32 %v581, %v477
        %v584 = vadd.f32 %v582, 1e-05
        %v585 = vadd.f32 %v583, 1e-05
        %v586 = vrsqrt.pop %v584
        %v587 = vmul.f32 %v586, %v584
        %v588 = vmul.f32 %v587, %v586
        %v589 = vmul.f32 0.5, %v588
        %v590 = vsub.f32 1.5, %v589
        %v591 = vmul.f32 %v586, %v590
        %vm592 = vweird.f32 %v584
        %vm593 = vweird.f32 %v586
        %vm594 = vmor %vm592, %vm593
        %v595 = vsel %vm594, %v586, %v591
        %v596 = vrsqrt.pop %v585
        %v597 = vmul.f32 %v596, %v585
        %v598 = vmul.f32 %v597, %v596
        %v599 = vmul.f32 0.5, %v598
        %v600 = vsub.f32 1.5, %v599
        %v601 = vmul.f32 %v596, %v600
        %vm602 = vweird.f32 %v585
        %vm603 = vweird.f32 %v596
        %vm604 = vmor %vm602, %vm603
        %v605 = vsel %vm604, %v596, %v601
        %v606 = vmul.f32 %v574, %v595
        %v607 = vmul.f32 %v575, %v605
        %v609 = vperm.slane %v566, 0
        %v611 = vmul.f32 %v606, %v609
        %v612 = vmul.f32 %v607, %v609
        %v614 = vperm.slane %v567, 0
        %v616 = vadd.f32 %v611, %v614
        %v617 = vadd.f32 %v612, %v614
        %v618 = vpack.c.bf16 %v617, %v616
        %v619 = vld [vmem:[#allocation7] sm:$0xf]
        %v620 = vld [vmem:[#allocation7 + $0x4] sm:$0xf]
        %v621 = vld [vmem:[#allocation7 + $0x8] sm:$0xf]
        %v622 = vld [vmem:[#allocation7 + $0xc] sm:$0xf]
        %v623 = vld [vmem:[#allocation7 + $0x10] sm:$0xf]
        %v624 = vld [vmem:[#allocation7 + $0x14] sm:$0xf]
        %v625 = vld [vmem:[#allocation7 + $0x18] sm:$0xf]
        %v626 = vld [vmem:[#allocation7 + $0x1c] sm:$0xf]
        %v627 = vld [vmem:[#allocation7 + $0x20] sm:$0xf]
        %v628 = vld [vmem:[#allocation7 + $0x24] sm:$0xf]
        %v629 = vld [vmem:[#allocation7 + $0x28] sm:$0xf]
        %v630 = vld [vmem:[#allocation7 + $0x2c] sm:$0xf]
        %v631 = vld [vmem:[#allocation7 + $0x30] sm:$0xf]
        %v632 = vld [vmem:[#allocation7 + $0x34] sm:$0xf]
        %v633 = vld [vmem:[#allocation7 + $0x38] sm:$0xf]
        %v634 = vld [vmem:[#allocation7 + $0x3c] sm:$0xf]
        %v651 = vunpack.c.l.b16 %v619
        %v652 = vunpack.c.l.b16 %v620
        %v653 = vunpack.c.l.b16 %v621
        %v654 = vunpack.c.l.b16 %v622
        %v655 = vunpack.c.l.b16 %v623
        %v656 = vunpack.c.l.b16 %v624
        %v657 = vunpack.c.l.b16 %v625
        %v658 = vunpack.c.l.b16 %v626
        %v659 = vunpack.c.l.b16 %v627
        %v660 = vunpack.c.l.b16 %v628
        %v661 = vunpack.c.l.b16 %v629
        %v662 = vunpack.c.l.b16 %v630
        %v663 = vunpack.c.l.b16 %v631
        %v664 = vunpack.c.l.b16 %v632
        %v665 = vunpack.c.l.b16 %v633
        %v666 = vunpack.c.l.b16 %v634
        %v667 = vpack.c.b16 %v652, %v651
        %v668 = vpack.c.b16 %v654, %v653
        %v669 = vpack.c.b16 %v656, %v655
        %v670 = vpack.c.b16 %v658, %v657
        %v671 = vpack.c.b16 %v660, %v659
        %v672 = vpack.c.b16 %v662, %v661
        %v673 = vpack.c.b16 %v664, %v663
        %v674 = vpack.c.b16 %v666, %v665
        %683 = vmatpush.bf16.msra.mxu0 %v674
        %684 = vmatpush.bf16.msra.mxu0 %v673
        %685 = vmatpush.bf16.msra.mxu0 %v672
        %686 = vmatpush.bf16.msra.mxu0 %v671
        %687 = vmatpush.bf16.msra.mxu0 %v670
        %688 = vmatpush.bf16.msra.mxu0 %v669
        %689 = vmatpush.bf16.msra.mxu0 %v668
        %690 = vmatpush.bf16.msra.mxu0 %v667
        %691 = vmatmul.bf16.gmra.mxu0 %v618
        %v692 = vpop.f32.mrf.mxu0
        %v693 = vadd.f32 0.0, %v692
        %v694 = vpop.f32.mrf.mxu0
        %v695 = vadd.f32 0.0, %v694
        %696 = vdwg.mxu0
        %v697 = vpack.c.bf16 %v693, %v693
        %v698 = vpack.c.bf16 %v695, %v695
        %v699 = vld [vmem:[#allocation8] sm:$0xff]
        %v700 = vld [vmem:[#allocation8 + $0x8] sm:$0xff]
        %v701 = vld [vmem:[#allocation8 + $0x10] sm:$0xff]
        %v702 = vld [vmem:[#allocation8 + $0x18] sm:$0xff]
        %v703 = vld [vmem:[#allocation8 + $0x20] sm:$0xff]
        %v704 = vld [vmem:[#allocation8 + $0x28] sm:$0xff]
        %v705 = vld [vmem:[#allocation8 + $0x30] sm:$0xff]
        %v706 = vld [vmem:[#allocation8 + $0x38] sm:$0xff]
        %v707 = vld [vmem:[#allocation8 + $0x40] sm:$0xff]
        %v708 = vld [vmem:[#allocation8 + $0x48] sm:$0xff]
        %v709 = vld [vmem:[#allocation8 + $0x50] sm:$0xff]
        %v710 = vld [vmem:[#allocation8 + $0x58] sm:$0xff]
        %v711 = vld [vmem:[#allocation8 + $0x60] sm:$0xff]
        %v712 = vld [vmem:[#allocation8 + $0x68] sm:$0xff]
        %v713 = vld [vmem:[#allocation8 + $0x70] sm:$0xff]
        %v714 = vld [vmem:[#allocation8 + $0x78] sm:$0xff]
        %v731 = vunpack.c.l.b16 %v699
        %v732 = vunpack.c.h.b16 %v699
        %v733 = vunpack.c.l.b16 %v700
        %v734 = vunpack.c.h.b16 %v700
        %v735 = vunpack.c.l.b16 %v701
        %v736 = vunpack.c.h.b16 %v701
        %v737 = vunpack.c.l.b16 %v702
        %v738 = vunpack.c.h.b16 %v702
        %v739 = vunpack.c.l.b16 %v703
        %v740 = vunpack.c.h.b16 %v703
        %v741 = vunpack.c.l.b16 %v704
        %v742 = vunpack.c.h.b16 %v704
        %v743 = vunpack.c.l.b16 %v705
        %v744 = vunpack.c.h.b16 %v705
        %v745 = vunpack.c.l.b16 %v706
        %v746 = vunpack.c.h.b16 %v706
        %v747 = vunpack.c.l.b16 %v707
        %v748 = vunpack.c.h.b16 %v707
        %v749 = vunpack.c.l.b16 %v708
        %v750 = vunpack.c.h.b16 %v708
        %v751 = vunpack.c.l.b16 %v709
        %v752 = vunpack.c.h.b16 %v709
        %v753 = vunpack.c.l.b16 %v710
        %v754 = vunpack.c.h.b16 %v710
        %v755 = vunpack.c.l.b16 %v711
        %v756 = vunpack.c.h.b16 %v711
        %v757 = vunpack.c.l.b16 %v712
        %v758 = vunpack.c.h.b16 %v712
        %v759 = vunpack.c.l.b16 %v713
        %v760 = vunpack.c.h.b16 %v713
        %v761 = vunpack.c.l.b16 %v714
        %v762 = vunpack.c.h.b16 %v714
        %v763 = vpack.c.b16 %v733, %v731
        %v764 = vpack.c.b16 %v734, %v732
        %v765 = vpack.c.b16 %v737, %v735
        %v766 = vpack.c.b16 %v738, %v736
        %v767 = vpack.c.b16 %v741, %v739
        %v768 = vpack.c.b16 %v742, %v740
        %v769 = vpack.c.b16 %v745, %v743
        %v770 = vpack.c.b16 %v746, %v744
        %v771 = vpack.c.b16 %v749, %v747
        %v772 = vpack.c.b16 %v750, %v748
        %v773 = vpack.c.b16 %v753, %v751
        %v774 = vpack.c.b16 %v754, %v752
        %v775 = vpack.c.b16 %v757, %v755
        %v776 = vpack.c.b16 %v758, %v756
        %v777 = vpack.c.b16 %v761, %v759
        %v778 = vpack.c.b16 %v762, %v760
        %795 = vmatpush.bf16.msra.mxu0 %v777
        %796 = vmatpush.bf16.msra.mxu0 %v775
        %797 = vmatpush.bf16.msra.mxu0 %v773
        %798 = vmatpush.bf16.msra.mxu0 %v771
        %799 = vmatpush.bf16.msra.mxu0 %v769
        %800 = vmatpush.bf16.msra.mxu0 %v767
        %801 = vmatpush.bf16.msra.mxu0 %v765
        %802 = vmatpush.bf16.msra.mxu0 %v763
        %803 = vmatmul.bf16.gmra.mxu0 %v618
        %v804 = vpop.f32.mrf.mxu0
        %v805 = vadd.f32 0.0, %v804
        %v806 = vpop.f32.mrf.mxu0
        %v807 = vadd.f32 0.0, %v806
        %808 = vdwg.mxu0
        %809 = vmatpush.bf16.msra.mxu0 %v778
        %810 = vmatpush.bf16.msra.mxu0 %v776
        %811 = vmatpush.bf16.msra.mxu0 %v774
        %812 = vmatpush.bf16.msra.mxu0 %v772
        %813 = vmatpush.bf16.msra.mxu0 %v770
        %814 = vmatpush.bf16.msra.mxu0 %v768
        %815 = vmatpush.bf16.msra.mxu0 %v766
        %816 = vmatpush.bf16.msra.mxu0 %v764
        %817 = vmatmul.bf16.gmra.mxu0 %v618
        %v818 = vpop.f32.mrf.mxu0
        %v819 = vadd.f32 0.0, %v818
        %v820 = vpop.f32.mrf.mxu0
        %v821 = vadd.f32 0.0, %v820
        %822 = vdwg.mxu0
        %v823 = vpack.c.bf16 %v819, %v805
        %v824 = vpack.c.bf16 %v821, %v807
        %825 = vmatpush.bf16.msra.mxu0 %v777
        %826 = vmatpush.bf16.msra.mxu0 %v775
        %827 = vmatpush.bf16.msra.mxu0 %v773
        %828 = vmatpush.bf16.msra.mxu0 %v771
        %829 = vmatpush.bf16.msra.mxu0 %v769
        %830 = vmatpush.bf16.msra.mxu0 %v767
        %831 = vmatpush.bf16.msra.mxu0 %v765
        %832 = vmatpush.bf16.msra.mxu0 %v763
        %833 = vmatmul.bf16.gmra.mxu0 %v564
        %v834 = vpop.f32.mrf.mxu0
        %v835 = vadd.f32 0.0, %v834
        %v836 = vpop.f32.mrf.mxu0
        %v837 = vadd.f32 0.0, %v836
        %838 = vmatmul.bf16.gmra.mxu0 %v565
        %v839 = vpop.f32.mrf.mxu0
        %v840 = vadd.f32 0.0, %v839
        %v841 = vpop.f32.mrf.mxu0
        %v842 = vadd.f32 0.0, %v841
        %843 = vdwg.mxu0
        %844 = vmatpush.bf16.msra.mxu0 %v778
        %845 = vmatpush.bf16.msra.mxu0 %v776
        %846 = vmatpush.bf16.msra.mxu0 %v774
        %847 = vmatpush.bf16.msra.mxu0 %v772
        %848 = vmatpush.bf16.msra.mxu0 %v770
        %849 = vmatpush.bf16.msra.mxu0 %v768
        %850 = vmatpush.bf16.msra.mxu0 %v766
        %851 = vmatpush.bf16.msra.mxu0 %v764
        %852 = vmatmul.bf16.gmra.mxu0 %v564
        %v853 = vpop.f32.mrf.mxu0
        %v854 = vadd.f32 0.0, %v853
        %v855 = vpop.f32.mrf.mxu0
        %v856 = vadd.f32 0.0, %v855
        %857 = vmatmul.bf16.gmra.mxu0 %v565
        %v858 = vpop.f32.mrf.mxu0
        %v859 = vadd.f32 0.0, %v858
        %v860 = vpop.f32.mrf.mxu0
        %v861 = vadd.f32 0.0, %v860
        %862 = vdwg.mxu0
        %v863 = vpack.c.bf16 %v854, %v835
        %v864 = vpack.c.bf16 %v856, %v837
        %v865 = vpack.c.bf16 %v859, %v840
        %v866 = vpack.c.bf16 %v861, %v842
        %v868 = vunpack.c.l.b16 %v823
        %v869 = vunpack.c.h.b16 %v823
        %v870 = vpack.c.b16 %v868, %v868
        %v871 = vpack.c.b16 %v869, %v869
        %v874 = vunpack.c.l.b16 %v863
        %v875 = vunpack.c.h.b16 %v863
        %v876 = vunpack.c.l.b16 %v864
        %v877 = vunpack.c.h.b16 %v864
        %v878 = vpack.c.b16 %v874, %v874
        %v879 = vpack.c.b16 %v875, %v875
        %v880 = vpack.c.b16 %v876, %v876
        %v881 = vpack.c.b16 %v877, %v877
        %vm884 = vcmask 1043456
        %v887 = vsel %vm884, %v870, %v878
        %v891 = vsel %vm884, %v871, %v879
        %893 = vxpose.xlu0.c.b16.start [1/8] %v697, 128
        %894 = vxpose.xlu0.c.b16.cont [2/8] 0, 128
        %895 = vxpose.xlu0.c.b16.cont [3/8] 0, 128
        %896 = vxpose.xlu0.c.b16.cont [4/8] 0, 128
        %897 = vxpose.xlu0.c.b16.cont [5/8] 0, 128
        %898 = vxpose.xlu0.c.b16.cont [6/8] 0, 128
        %899 = vxpose.xlu0.c.b16.cont [7/8] 0, 128
        %900 = vxpose.xlu0.c.b16.end [8/8] 0, 128
        %v901 = vpop.trf.xlu0
        %v902 = vpop.trf.xlu0
        %v903 = vpop.trf.xlu0
        %v904 = vpop.trf.xlu0
        %v905 = vpop.trf.xlu0
        %v906 = vpop.trf.xlu0
        %v907 = vpop.trf.xlu0
        %v908 = vpop.trf.xlu0
        %909 = vxpose.xlu0.c.b16.start [1/8] %v901, 128
        %910 = vxpose.xlu0.c.b16.cont [2/8] %v902, 128
        %911 = vxpose.xlu0.c.b16.cont [3/8] 0, 128
        %912 = vxpose.xlu0.c.b16.cont [4/8] 0, 128
        %913 = vxpose.xlu0.c.b16.cont [5/8] 0, 128
        %914 = vxpose.xlu0.c.b16.cont [6/8] 0, 128
        %915 = vxpose.xlu0.c.b16.cont [7/8] 0, 128
        %916 = vxpose.xlu0.c.b16.end [8/8] 0, 128
        %v917 = vpop.trf.xlu0
        %v918 = vpop.trf.xlu0
        %v919 = vpop.trf.xlu0
        %v920 = vpop.trf.xlu0
        %v921 = vpop.trf.xlu0
        %v922 = vpop.trf.xlu0
        %v923 = vpop.trf.xlu0
        %v924 = vpop.trf.xlu0
        %925 = vxpose.xlu0.c.b16.start [1/8] %v903, 128
        %926 = vxpose.xlu0.c.b16.cont [2/8] %v904, 128
        %927 = vxpose.xlu0.c.b16.cont [3/8] 0, 128
        %928 = vxpose.xlu0.c.b16.cont [4/8] 0, 128
        %929 = vxpose.xlu0.c.b16.cont [5/8] 0, 128
        %930 = vxpose.xlu0.c.b16.cont [6/8] 0, 128
        %931 = vxpose.xlu0.c.b16.cont [7/8] 0, 128
        %932 = vxpose.xlu0.c.b16.end [8/8] 0, 128
        %v933 = vpop.trf.xlu0
        %v934 = vpop.trf.xlu0
        %v935 = vpop.trf.xlu0
        %v936 = vpop.trf.xlu0
        %v937 = vpop.trf.xlu0
        %v938 = vpop.trf.xlu0
        %v939 = vpop.trf.xlu0
        %v940 = vpop.trf.xlu0
        %941 = vxpose.xlu0.c.b16.start [1/8] %v905, 128
        %942 = vxpose.xlu0.c.b16.cont [2/8] %v906, 128
        %943 = vxpose.xlu0.c.b16.cont [3/8] 0, 128
        %944 = vxpose.xlu0.c.b16.cont [4/8] 0, 128
        %945 = vxpose.xlu0.c.b16.cont [5/8] 0, 128
        %946 = vxpose.xlu0.c.b16.cont [6/8] 0, 128
        %947 = vxpose.xlu0.c.b16.cont [7/8] 0, 128
        %948 = vxpose.xlu0.c.b16.end [8/8] 0, 128
        %v949 = vpop.trf.xlu0
        %v950 = vpop.trf.xlu0
        %v951 = vpop.trf.xlu0
        %v952 = vpop.trf.xlu0
        %v953 = vpop.trf.xlu0
        %v954 = vpop.trf.xlu0
        %v955 = vpop.trf.xlu0
        %v956 = vpop.trf.xlu0
        %957 = vxpose.xlu0.c.b16.start [1/8] %v907, 128
        %958 = vxpose.xlu0.c.b16.cont [2/8] %v908, 128
        %959 = vxpose.xlu0.c.b16.cont [3/8] 0, 128
        %960 = vxpose.xlu0.c.b16.cont [4/8] 0, 128
        %961 = vxpose.xlu0.c.b16.cont [5/8] 0, 128
        %962 = vxpose.xlu0.c.b16.cont [6/8] 0, 128
        %963 = vxpose.xlu0.c.b16.cont [7/8] 0, 128
        %964 = vxpose.xlu0.c.b16.end [8/8] 0, 128
        %v965 = vpop.trf.xlu0
        %v966 = vpop.trf.xlu0
        %v967 = vpop.trf.xlu0
        %v968 = vpop.trf.xlu0
        %v969 = vpop.trf.xlu0
        %v970 = vpop.trf.xlu0
        %v971 = vpop.trf.xlu0
        %v972 = vpop.trf.xlu0
        %973 = vxpose.xlu0.c.b16.start [1/8] %v887, 128
        %974 = vxpose.xlu0.c.b16.cont [2/8] %v880, 128
        %975 = vxpose.xlu0.c.b16.cont [3/8] 0, 128
        %976 = vxpose.xlu0.c.b16.cont [4/8] 0, 128
        %977 = vxpose.xlu0.c.b16.cont [5/8] 0, 128
        %978 = vxpose.xlu0.c.b16.cont [6/8] 0, 128
        %979 = vxpose.xlu0.c.b16.cont [7/8] 0, 128
        %980 = vxpose.xlu0.c.b16.end [8/8] 0, 128
        %v981 = vpop.trf.xlu0
        %v982 = vpop.trf.xlu0
        %v983 = vpop.trf.xlu0
        %v984 = vpop.trf.xlu0
        %v985 = vpop.trf.xlu0
        %v986 = vpop.trf.xlu0
        %v987 = vpop.trf.xlu0
        %v988 = vpop.trf.xlu0
        %989 = vxpose.xlu0.c.b16.start [1/8] %v891, 128
        %990 = vxpose.xlu0.c.b16.cont [2/8] %v881, 128
        %991 = vxpose.xlu0.c.b16.cont [3/8] 0, 128
        %992 = vxpose.xlu0.c.b16.cont [4/8] 0, 128
        %993 = vxpose.xlu0.c.b16.cont [5/8] 0, 128
        %994 = vxpose.xlu0.c.b16.cont [6/8] 0, 128
        %995 = vxpose.xlu0.c.b16.cont [7/8] 0, 128
        %996 = vxpose.xlu0.c.b16.end [8/8] 0, 128
        %v997 = vpop.trf.xlu0
        %v998 = vpop.trf.xlu0
        %v999 = vpop.trf.xlu0
        %v1000 = vpop.trf.xlu0
        %v1001 = vpop.trf.xlu0
        %v1002 = vpop.trf.xlu0
        %v1003 = vpop.trf.xlu0
        %v1004 = vpop.trf.xlu0
        %vm1005 = vcmask 261120
        %v1007 = vsel %vm1005, %v917, 0
        %1009 = vmatpush.bf16.msra.mxu0 0
        %1010 = vmatpush.bf16.msra.mxu0 0
        %1011 = vmatpush.bf16.msra.mxu0 0
        %1012 = vmatpush.bf16.msra.mxu0 0
        %1013 = vmatpush.bf16.msra.mxu0 0
        %1014 = vmatpush.bf16.msra.mxu0 0
        %1015 = vmatpush.bf16.msra.mxu0 %v982
        %1016 = vmatpush.bf16.msra.mxu0 %v981
        %1017 = vmatmul.bf16.gmra.mxu0 %v1007
        %v1018 = vpop.f32.mrf.mxu0
        %v1019 = vadd.f32 0.0, %v1018
        %v1020 = vpop.f32.mrf.mxu0
        %1021 = vdwg.mxu0
        %v1023 = vsel %vm1005, %v933, 0
        %1025 = vmatpush.bf16.msra.mxu0 0
        %1026 = vmatpush.bf16.msra.mxu0 0
        %1027 = vmatpush.bf16.msra.mxu0 0
        %1028 = vmatpush.bf16.msra.mxu0 0
        %1029 = vmatpush.bf16.msra.mxu0 0
        %1030 = vmatpush.bf16.msra.mxu0 0
        %1031 = vmatpush.bf16.msra.mxu0 %v984
        %1032 = vmatpush.bf16.msra.mxu0 %v983
        %1033 = vmatmul.bf16.gmra.mxu0 %v1023
        %v1034 = vpop.f32.mrf.mxu0
        %v1035 = vadd.f32 0.0, %v1034
        %v1036 = vpop.f32.mrf.mxu0
        %1037 = vdwg.mxu0
        %v1039 = vsel %vm1005, %v949, 0
        %1041 = vmatpush.bf16.msra.mxu0 0
        %1042 = vmatpush.bf16.msra.mxu0 0
        %1043 = vmatpush.bf16.msra.mxu0 0
        %1044 = vmatpush.bf16.msra.mxu0 0
        %1045 = vmatpush.bf16.msra.mxu0 0
        %1046 = vmatpush.bf16.msra.mxu0 0
        %1047 = vmatpush.bf16.msra.mxu0 %v986
        %1048 = vmatpush.bf16.msra.mxu0 %v985
        %1049 = vmatmul.bf16.gmra.mxu0 %v1039
        %v1050 = vpop.f32.mrf.mxu0
        %v1051 = vadd.f32 0.0, %v1050
        %v1052 = vpop.f32.mrf.mxu0
        %1053 = vdwg.mxu0
        %v1055 = vsel %vm1005, %v965, 0
        %1057 = vmatpush.bf16.msra.mxu0 0
        %1058 = vmatpush.bf16.msra.mxu0 0
        %1059 = vmatpush.bf16.msra.mxu0 0
        %1060 = vmatpush.bf16.msra.mxu0 0
        %1061 = vmatpush.bf16.msra.mxu0 0
        %1062 = vmatpush.bf16.msra.mxu0 0
        %1063 = vmatpush.bf16.msra.mxu0 %v988
        %1064 = vmatpush.bf16.msra.mxu0 %v987
        %1065 = vmatmul.bf16.gmra.mxu0 %v1055
        %v1066 = vpop.f32.mrf.mxu0
        %v1067 = vadd.f32 0.0, %v1066
        %v1068 = vpop.f32.mrf.mxu0
        %1069 = vdwg.mxu0
        %vm1070 = vcmask 195584
        %v1071 = vsel %vm1070, %v1019, -inf
        %1072 = vmax.xlane.f32.xlu0 %v1071
        %v1073 = vpop.xlane.xlu0 %1072
        %v1074 = vsel %vm1070, %v1035, -inf
        %1075 = vmax.xlane.f32.xlu0 %v1074
        %v1076 = vpop.xlane.xlu0 %1075
        %v1077 = vsel %vm1070, %v1051, -inf
        %1078 = vmax.xlane.f32.xlu0 %v1077
        %v1079 = vpop.xlane.xlu0 %1078
        %v1080 = vsel %vm1070, %v1067, -inf
        %1081 = vmax.xlane.f32.xlu0 %v1080
        %v1082 = vpop.xlane.xlu0 %1081
        %v1083 = vsub.f32 %v1019, %v1073
        %v1084 = vsub.f32 %v1035, %v1076
        %v1085 = vsub.f32 %v1051, %v1079
        %v1086 = vsub.f32 %v1067, %v1082
        %v1087 = vmul.f32 %v1083, 1.442695
        %v1088 = vpow.pop %v1087
        %v1089 = vmul.f32 %v1084, 1.442695
        %v1090 = vpow.pop %v1089
        %v1091 = vmul.f32 %v1085, 1.442695
        %v1092 = vpow.pop %v1091
        %v1093 = vmul.f32 %v1086, 1.442695
        %v1094 = vpow.pop %v1093
        %v1095 = vsel %vm1070, %v1088, 0.0
        %1096 = vadd.xlane.f32.xlu0 %v1095
        %v1097 = vpop.xlane.xlu0 %1096
        %v1098 = vsel %vm1070, %v1090, 0.0
        %1099 = vadd.xlane.f32.xlu0 %v1098
        %v1100 = vpop.xlane.xlu0 %1099
        %v1101 = vsel %vm1070, %v1092, 0.0
        %1102 = vadd.xlane.f32.xlu0 %v1101
        %v1103 = vpop.xlane.xlu0 %1102
        %v1104 = vsel %vm1070, %v1094, 0.0
        %1105 = vadd.xlane.f32.xlu0 %v1104
        %v1106 = vpop.xlane.xlu0 %1105
        %v1107 = vrcp.pop %v1097
        %v1108 = vrcp.pop %v1100
        %v1109 = vrcp.pop %v1103
        %v1110 = vrcp.pop %v1106
        %v1111 = vmul.f32 %v1088, %v1107
        %v1112 = vmul.f32 %v1090, %v1108
        %v1113 = vmul.f32 %v1092, %v1109
        %v1114 = vmul.f32 %v1094, %v1110
        %v1115 = vpack.c.bf16 %v1111, %v1111
        %v1116 = vpack.c.bf16 %v1112, %v1112
        %v1117 = vpack.c.bf16 %v1113, %v1113
        %v1118 = vpack.c.bf16 %v1114, %v1114
        %v1120 = vsel %vm1070, %v1115, 0
        %v1123 = vsel %vm1070, %v997, 0
        %v1126 = vsel %vm1070, %v998, 0
        %1128 = vmatpush.bf16.xpose.msra.mxu0 0
        %1129 = vmatpush.bf16.xpose.msra.mxu0 0
        %1130 = vmatpush.bf16.xpose.msra.mxu0 0
        %1131 = vmatpush.bf16.xpose.msra.mxu0 0
        %1132 = vmatpush.bf16.xpose.msra.mxu0 0
        %1133 = vmatpush.bf16.xpose.msra.mxu0 0
        %1134 = vmatpush.bf16.xpose.msra.mxu0 %v1126
        %1135 = vmatpush.bf16.xpose.msra.mxu0 %v1123
        %1136 = vmatmul.bf16.gmra.mxu0 %v1120
        %v1137 = vpop.f32.mrf.mxu0
        %v1138 = vadd.f32 0.0, %v1137
        %v1139 = vpop.f32.mrf.mxu0
        %1140 = vdwg.mxu0
        %v1142 = vsel %vm1070, %v1116, 0
        %v1145 = vsel %vm1070, %v999, 0
        %v1148 = vsel %vm1070, %v1000, 0
        %1150 = vmatpush.bf16.xpose.msra.mxu0 0
        %1151 = vmatpush.bf16.xpose.msra.mxu0 0
        %1152 = vmatpush.bf16.xpose.msra.mxu0 0
        %1153 = vmatpush.bf16.xpose.msra.mxu0 0
        %1154 = vmatpush.bf16.xpose.msra.mxu0 0
        %1155 = vmatpush.bf16.xpose.msra.mxu0 0
        %1156 = vmatpush.bf16.xpose.msra.mxu0 %v1148
        %1157 = vmatpush.bf16.xpose.msra.mxu0 %v1145
        %1158 = vmatmul.bf16.gmra.mxu0 %v1142
        %v1159 = vpop.f32.mrf.mxu0
        %v1160 = vadd.f32 0.0, %v1159
        %v1161 = vpop.f32.mrf.mxu0
        %1162 = vdwg.mxu0
        %v1164 = vsel %vm1070, %v1117, 0
        %v1167 = vsel %vm1070, %v1001, 0
        %v1170 = vsel %vm1070, %v1002, 0
        %1172 = vmatpush.bf16.xpose.msra.mxu0 0
        %1173 = vmatpush.bf16.xpose.msra.mxu0 0
        %1174 = vmatpush.bf16.xpose.msra.mxu0 0
        %1175 = vmatpush.bf16.xpose.msra.mxu0 0
        %1176 = vmatpush.bf16.xpose.msra.mxu0 0
        %1177 = vmatpush.bf16.xpose.msra.mxu0 0
        %1178 = vmatpush.bf16.xpose.msra.mxu0 %v1170
        %1179 = vmatpush.bf16.xpose.msra.mxu0 %v1167
        %1180 = vmatmul.bf16.gmra.mxu0 %v1164
        %v1181 = vpop.f32.mrf.mxu0
        %v1182 = vadd.f32 0.0, %v1181
        %v1183 = vpop.f32.mrf.mxu0
        %1184 = vdwg.mxu0
        %v1186 = vsel %vm1070, %v1118, 0
        %v1189 = vsel %vm1070, %v1003, 0
        %v1192 = vsel %vm1070, %v1004, 0
        %1194 = vmatpush.bf16.xpose.msra.mxu0 0
        %1195 = vmatpush.bf16.xpose.msra.mxu0 0
        %1196 = vmatpush.bf16.xpose.msra.mxu0 0
        %1197 = vmatpush.bf16.xpose.msra.mxu0 0
        %1198 = vmatpush.bf16.xpose.msra.mxu0 0
        %1199 = vmatpush.bf16.xpose.msra.mxu0 0
        %1200 = vmatpush.bf16.xpose.msra.mxu0 %v1192
        %1201 = vmatpush.bf16.xpose.msra.mxu0 %v1189
        %1202 = vmatmul.bf16.gmra.mxu0 %v1186
        %v1203 = vpop.f32.mrf.mxu0
        %v1204 = vadd.f32 0.0, %v1203
        %v1205 = vpop.f32.mrf.mxu0
        %1206 = vdwg.mxu0
        %1207 = vxpose.xlu0.b32.start [1/16] %v1138, 128
        %1208 = vxpose.xlu0.b32.cont [2/16] 0.0, 128
        %1209 = vxpose.xlu0.b32.cont [3/16] 0.0, 128
        %1210 = vxpose.xlu0.b32.cont [4/16] 0.0, 128
        %1211 = vxpose.xlu0.b32.cont [5/16] 0.0, 128
        %1212 = vxpose.xlu0.b32.cont [6/16] 0.0, 128
        %1213 = vxpose.xlu0.b32.cont [7/16] 0.0, 128
        %1214 = vxpose.xlu0.b32.cont [8/16] 0.0, 128
        %1215 = vxpose.xlu0.b32.cont [9/16] 0.0, 128
        %1216 = vxpose.xlu0.b32.cont [10/16] 0.0, 128
        %1217 = vxpose.xlu0.b32.cont [11/16] 0.0, 128
        %1218 = vxpose.xlu0.b32.cont [12/16] 0.0, 128
        %1219 = vxpose.xlu0.b32.cont [13/16] 0.0, 128
        %1220 = vxpose.xlu0.b32.cont [14/16] 0.0, 128
        %1221 = vxpose.xlu0.b32.cont [15/16] 0.0, 128
        %1222 = vxpose.xlu0.b32.end [16/16] 0.0, 128
        %v1223 = vpop.trf.xlu0
        %v1224 = vpop.trf.xlu0
        %v1225 = vpop.trf.xlu0
        %v1226 = vpop.trf.xlu0
        %v1227 = vpop.trf.xlu0
        %v1228 = vpop.trf.xlu0
        %v1229 = vpop.trf.xlu0
        %v1230 = vpop.trf.xlu0
        %v1231 = vpop.trf.xlu0
        %v1232 = vpop.trf.xlu0
        %v1233 = vpop.trf.xlu0
        %v1234 = vpop.trf.xlu0
        %v1235 = vpop.trf.xlu0
        %v1236 = vpop.trf.xlu0
        %v1237 = vpop.trf.xlu0
        %v1238 = vpop.trf.xlu0
        %1239 = vxpose.xlu0.b32.start [1/16] %v1160, 128
        %1240 = vxpose.xlu0.b32.cont [2/16] 0.0, 128
        %1241 = vxpose.xlu0.b32.cont [3/16] 0.0, 128
        %1242 = vxpose.xlu0.b32.cont [4/16] 0.0, 128
        %1243 = vxpose.xlu0.b32.cont [5/16] 0.0, 128
        %1244 = vxpose.xlu0.b32.cont [6/16] 0.0, 128
        %1245 = vxpose.xlu0.b32.cont [7/16] 0.0, 128
        %1246 = vxpose.xlu0.b32.cont [8/16] 0.0, 128
        %1247 = vxpose.xlu0.b32.cont [9/16] 0.0, 128
        %1248 = vxpose.xlu0.b32.cont [10/16] 0.0, 128
        %1249 = vxpose.xlu0.b32.cont [11/16] 0.0, 128
        %1250 = vxpose.xlu0.b32.cont [12/16] 0.0, 128
        %1251 = vxpose.xlu0.b32.cont [13/16] 0.0, 128
        %1252 = vxpose.xlu0.b32.cont [14/16] 0.0, 128
        %1253 = vxpose.xlu0.b32.cont [15/16] 0.0, 128
        %1254 = vxpose.xlu0.b32.end [16/16] 0.0, 128
        %v1255 = vpop.trf.xlu0
        %v1256 = vpop.trf.xlu0
        %v1257 = vpop.trf.xlu0
        %v1258 = vpop.trf.xlu0
        %v1259 = vpop.trf.xlu0
        %v1260 = vpop.trf.xlu0
        %v1261 = vpop.trf.xlu0
        %v1262 = vpop.trf.xlu0
        %v1263 = vpop.trf.xlu0
        %v1264 = vpop.trf.xlu0
        %v1265 = vpop.trf.xlu0
        %v1266 = vpop.trf.xlu0
        %v1267 = vpop.trf.xlu0
        %v1268 = vpop.trf.xlu0
        %v1269 = vpop.trf.xlu0
        %v1270 = vpop.trf.xlu0
        %1271 = vxpose.xlu0.b32.start [1/16] %v1182, 128
        %1272 = vxpose.xlu0.b32.cont [2/16] 0.0, 128
        %1273 = vxpose.xlu0.b32.cont [3/16] 0.0, 128
        %1274 = vxpose.xlu0.b32.cont [4/16] 0.0, 128
        %1275 = vxpose.xlu0.b32.cont [5/16] 0.0, 128
        %1276 = vxpose.xlu0.b32.cont [6/16] 0.0, 128
        %1277 = vxpose.xlu0.b32.cont [7/16] 0.0, 128
        %1278 = vxpose.xlu0.b32.cont [8/16] 0.0, 128
        %1279 = vxpose.xlu0.b32.cont [9/16] 0.0, 128
        %1280 = vxpose.xlu0.b32.cont [10/16] 0.0, 128
        %1281 = vxpose.xlu0.b32.cont [11/16] 0.0, 128
        %1282 = vxpose.xlu0.b32.cont [12/16] 0.0, 128
        %1283 = vxpose.xlu0.b32.cont [13/16] 0.0, 128
        %1284 = vxpose.xlu0.b32.cont [14/16] 0.0, 128
        %1285 = vxpose.xlu0.b32.cont [15/16] 0.0, 128
        %1286 = vxpose.xlu0.b32.end [16/16] 0.0, 128
        %v1287 = vpop.trf.xlu0
        %v1288 = vpop.trf.xlu0
        %v1289 = vpop.trf.xlu0
        %v1290 = vpop.trf.xlu0
        %v1291 = vpop.trf.xlu0
        %v1292 = vpop.trf.xlu0
        %v1293 = vpop.trf.xlu0
        %v1294 = vpop.trf.xlu0
        %v1295 = vpop.trf.xlu0
        %v1296 = vpop.trf.xlu0
        %v1297 = vpop.trf.xlu0
        %v1298 = vpop.trf.xlu0
        %v1299 = vpop.trf.xlu0
        %v1300 = vpop.trf.xlu0
        %v1301 = vpop.trf.xlu0
        %v1302 = vpop.trf.xlu0
        %1303 = vxpose.xlu0.b32.start [1/16] %v1204, 128
        %1304 = vxpose.xlu0.b32.cont [2/16] 0.0, 128
        %1305 = vxpose.xlu0.b32.cont [3/16] 0.0, 128
        %1306 = vxpose.xlu0.b32.cont [4/16] 0.0, 128
        %1307 = vxpose.xlu0.b32.cont [5/16] 0.0, 128
        %1308 = vxpose.xlu0.b32.cont [6/16] 0.0, 128
        %1309 = vxpose.xlu0.b32.cont [7/16] 0.0, 128
        %1310 = vxpose.xlu0.b32.cont [8/16] 0.0, 128
        %1311 = vxpose.xlu0.b32.cont [9/16] 0.0, 128
        %1312 = vxpose.xlu0.b32.cont [10/16] 0.0, 128
        %1313 = vxpose.xlu0.b32.cont [11/16] 0.0, 128
        %1314 = vxpose.xlu0.b32.cont [12/16] 0.0, 128
        %1315 = vxpose.xlu0.b32.cont [13/16] 0.0, 128
        %1316 = vxpose.xlu0.b32.cont [14/16] 0.0, 128
        %1317 = vxpose.xlu0.b32.cont [15/16] 0.0, 128
        %1318 = vxpose.xlu0.b32.end [16/16] 0.0, 128
        %v1319 = vpop.trf.xlu0
        %v1320 = vpop.trf.xlu0
        %v1321 = vpop.trf.xlu0
        %v1322 = vpop.trf.xlu0
        %v1323 = vpop.trf.xlu0
        %v1324 = vpop.trf.xlu0
        %v1325 = vpop.trf.xlu0
        %v1326 = vpop.trf.xlu0
        %v1327 = vpop.trf.xlu0
        %v1328 = vpop.trf.xlu0
        %v1329 = vpop.trf.xlu0
        %v1330 = vpop.trf.xlu0
        %v1331 = vpop.trf.xlu0
        %v1332 = vpop.trf.xlu0
        %v1333 = vpop.trf.xlu0
        %v1334 = vpop.trf.xlu0
        %1335 = vxpose.xlu0.b32.start [1/16] %v1223, 128
        %1336 = vxpose.xlu0.b32.cont [2/16] %v1224, 128
        %1337 = vxpose.xlu0.b32.cont [3/16] %v1225, 128
        %1338 = vxpose.xlu0.b32.cont [4/16] %v1226, 128
        %1339 = vxpose.xlu0.b32.cont [5/16] %v1255, 128
        %1340 = vxpose.xlu0.b32.cont [6/16] %v1256, 128
        %1341 = vxpose.xlu0.b32.cont [7/16] %v1257, 128
        %1342 = vxpose.xlu0.b32.cont [8/16] %v1258, 128
        %1343 = vxpose.xlu0.b32.cont [9/16] %v1287, 128
        %1344 = vxpose.xlu0.b32.cont [10/16] %v1288, 128
        %1345 = vxpose.xlu0.b32.cont [11/16] %v1289, 128
        %1346 = vxpose.xlu0.b32.cont [12/16] %v1290, 128
        %1347 = vxpose.xlu0.b32.cont [13/16] %v1319, 128
        %1348 = vxpose.xlu0.b32.cont [14/16] %v1320, 128
        %1349 = vxpose.xlu0.b32.cont [15/16] %v1321, 128
        %1350 = vxpose.xlu0.b32.end [16/16] %v1322, 128
        %v1351 = vpop.trf.xlu0
        %v1352 = vpop.trf.xlu0
        %v1353 = vpop.trf.xlu0
        %v1354 = vpop.trf.xlu0
        %v1355 = vpop.trf.xlu0
        %v1356 = vpop.trf.xlu0
        %v1357 = vpop.trf.xlu0
        %v1358 = vpop.trf.xlu0
        %v1359 = vpop.trf.xlu0
        %v1360 = vpop.trf.xlu0
        %v1361 = vpop.trf.xlu0
        %v1362 = vpop.trf.xlu0
        %v1363 = vpop.trf.xlu0
        %v1364 = vpop.trf.xlu0
        %v1365 = vpop.trf.xlu0
        %v1366 = vpop.trf.xlu0
        %v1368 = vunpack.c.l.b16 %v824
        %v1369 = vunpack.c.h.b16 %v824
        %v1370 = vpack.c.b16 %v1368, %v1368
        %v1371 = vpack.c.b16 %v1369, %v1369
        %v1374 = vunpack.c.l.b16 %v865
        %v1375 = vunpack.c.h.b16 %v865
        %v1376 = vunpack.c.l.b16 %v866
        %v1377 = vunpack.c.h.b16 %v866
        %v1378 = vpack.c.b16 %v1374, %v1374
        %v1379 = vpack.c.b16 %v1375, %v1375
        %v1380 = vpack.c.b16 %v1376, %v1376
        %v1381 = vpack.c.b16 %v1377, %v1377
        %v1386 = vsel %vm884, %v1370, %v1378
        %v1390 = vsel %vm884, %v1371, %v1379
        %1392 = vxpose.xlu0.c.b16.start [1/8] %v698, 128
        %1393 = vxpose.xlu0.c.b16.cont [2/8] 0, 128
        %1394 = vxpose.xlu0.c.b16.cont [3/8] 0, 128
        %1395 = vxpose.xlu0.c.b16.cont [4/8] 0, 128
        %1396 = vxpose.xlu0.c.b16.cont [5/8] 0, 128
        %1397 = vxpose.xlu0.c.b16.cont [6/8] 0, 128
        %1398 = vxpose.xlu0.c.b16.cont [7/8] 0, 128
        %1399 = vxpose.xlu0.c.b16.end [8/8] 0, 128
        %v1400 = vpop.trf.xlu0
        %v1401 = vpop.trf.xlu0
        %v1402 = vpop.trf.xlu0
        %v1403 = vpop.trf.xlu0
        %v1404 = vpop.trf.xlu0
        %v1405 = vpop.trf.xlu0
        %v1406 = vpop.trf.xlu0
        %v1407 = vpop.trf.xlu0
        %1408 = vxpose.xlu0.c.b16.start [1/8] %v1400, 128
        %1409 = vxpose.xlu0.c.b16.cont [2/8] %v1401, 128
        %1410 = vxpose.xlu0.c.b16.cont [3/8] 0, 128
        %1411 = vxpose.xlu0.c.b16.cont [4/8] 0, 128
        %1412 = vxpose.xlu0.c.b16.cont [5/8] 0, 128
        %1413 = vxpose.xlu0.c.b16.cont [6/8] 0, 128
        %1414 = vxpose.xlu0.c.b16.cont [7/8] 0, 128
        %1415 = vxpose.xlu0.c.b16.end [8/8] 0, 128
        %v1416 = vpop.trf.xlu0
        %v1417 = vpop.trf.xlu0
        %v1418 = vpop.trf.xlu0
        %v1419 = vpop.trf.xlu0
        %v1420 = vpop.trf.xlu0
        %v1421 = vpop.trf.xlu0
        %v1422 = vpop.trf.xlu0
        %v1423 = vpop.trf.xlu0
        %1424 = vxpose.xlu0.c.b16.start [1/8] %v1402, 128
        %1425 = vxpose.xlu0.c.b16.cont [2/8] %v1403, 128
        %1426 = vxpose.xlu0.c.b16.cont [3/8] 0, 128
        %1427 = vxpose.xlu0.c.b16.cont [4/8] 0, 128
        %1428 = vxpose.xlu0.c.b16.cont [5/8] 0, 128
        %1429 = vxpose.xlu0.c.b16.cont [6/8] 0, 128
        %1430 = vxpose.xlu0.c.b16.cont [7/8] 0, 128
        %1431 = vxpose.xlu0.c.b16.end [8/8] 0, 128
        %v1432 = vpop.trf.xlu0
        %v1433 = vpop.trf.xlu0
        %v1434 = vpop.trf.xlu0
        %v1435 = vpop.trf.xlu0
        %v1436 = vpop.trf.xlu0
        %v1437 = vpop.trf.xlu0
        %v1438 = vpop.trf.xlu0
        %v1439 = vpop.trf.xlu0
        %1440 = vxpose.xlu0.c.b16.start [1/8] %v1404, 128
        %1441 = vxpose.xlu0.c.b16.cont [2/8] %v1405, 128
        %1442 = vxpose.xlu0.c.b16.cont [3/8] 0, 128
        %1443 = vxpose.xlu0.c.b16.cont [4/8] 0, 128
        %1444 = vxpose.xlu0.c.b16.cont [5/8] 0, 128
        %1445 = vxpose.xlu0.c.b16.cont [6/8] 0, 128
        %1446 = vxpose.xlu0.c.b16.cont [7/8] 0, 128
        %1447 = vxpose.xlu0.c.b16.end [8/8] 0, 128
        %v1448 = vpop.trf.xlu0
        %v1449 = vpop.trf.xlu0
        %v1450 = vpop.trf.xlu0
        %v1451 = vpop.trf.xlu0
        %v1452 = vpop.trf.xlu0
        %v1453 = vpop.trf.xlu0
        %v1454 = vpop.trf.xlu0
        %v1455 = vpop.trf.xlu0
        %1456 = vxpose.xlu0.c.b16.start [1/8] %v1406, 128
        %1457 = vxpose.xlu0.c.b16.cont [2/8] %v1407, 128
        %1458 = vxpose.xlu0.c.b16.cont [3/8] 0, 128
        %1459 = vxpose.xlu0.c.b16.cont [4/8] 0, 128
        %1460 = vxpose.xlu0.c.b16.cont [5/8] 0, 128
        %1461 = vxpose.xlu0.c.b16.cont [6/8] 0, 128
        %1462 = vxpose.xlu0.c.b16.cont [7/8] 0, 128
        %1463 = vxpose.xlu0.c.b16.end [8/8] 0, 128
        %v1464 = vpop.trf.xlu0
        %v1465 = vpop.trf.xlu0
        %v1466 = vpop.trf.xlu0
        %v1467 = vpop.trf.xlu0
        %v1468 = vpop.trf.xlu0
        %v1469 = vpop.trf.xlu0
        %v1470 = vpop.trf.xlu0
        %v1471 = vpop.trf.xlu0
        %1472 = vxpose.xlu0.c.b16.start [1/8] %v1386, 128
        %1473 = vxpose.xlu0.c.b16.cont [2/8] %v1380, 128
        %1474 = vxpose.xlu0.c.b16.cont [3/8] 0, 128
        %1475 = vxpose.xlu0.c.b16.cont [4/8] 0, 128
        %1476 = vxpose.xlu0.c.b16.cont [5/8] 0, 128
        %1477 = vxpose.xlu0.c.b16.cont [6/8] 0, 128
        %1478 = vxpose.xlu0.c.b16.cont [7/8] 0, 128
        %1479 = vxpose.xlu0.c.b16.end [8/8] 0, 128
        %v1480 = vpop.trf.xlu0
        %v1481 = vpop.trf.xlu0
        %v1482 = vpop.trf.xlu0
        %v1483 = vpop.trf.xlu0
        %v1484 = vpop.trf.xlu0
        %v1485 = vpop.trf.xlu0
        %v1486 = vpop.trf.xlu0
        %v1487 = vpop.trf.xlu0
        %1488 = vxpose.xlu0.c.b16.start [1/8] %v1390, 128
        %1489 = vxpose.xlu0.c.b16.cont [2/8] %v1381, 128
        %1490 = vxpose.xlu0.c.b16.cont [3/8] 0, 128
        %1491 = vxpose.xlu0.c.b16.cont [4/8] 0, 128
        %1492 = vxpose.xlu0.c.b16.cont [5/8] 0, 128
        %1493 = vxpose.xlu0.c.b16.cont [6/8] 0, 128
        %1494 = vxpose.xlu0.c.b16.cont [7/8] 0, 128
        %1495 = vxpose.xlu0.c.b16.end [8/8] 0, 128
        %v1496 = vpop.trf.xlu0
        %v1497 = vpop.trf.xlu0
        %v1498 = vpop.trf.xlu0
        %v1499 = vpop.trf.xlu0
        %v1500 = vpop.trf.xlu0
        %v1501 = vpop.trf.xlu0
        %v1502 = vpop.trf.xlu0
        %v1503 = vpop.trf.xlu0
        %v1505 = vsel %vm1005, %v1416, 0
        %1507 = vmatpush.bf16.msra.mxu0 0
        %1508 = vmatpush.bf16.msra.mxu0 0
        %1509 = vmatpush.bf16.msra.mxu0 0
        %1510 = vmatpush.bf16.msra.mxu0 0
        %1511 = vmatpush.bf16.msra.mxu0 0
        %1512 = vmatpush.bf16.msra.mxu0 0
        %1513 = vmatpush.bf16.msra.mxu0 %v1481
        %1514 = vmatpush.bf16.msra.mxu0 %v1480
        %1515 = vmatmul.bf16.gmra.mxu0 %v1505
        %v1516 = vpop.f32.mrf.mxu0
        %v1517 = vadd.f32 0.0, %v1516
        %v1518 = vpop.f32.mrf.mxu0
        %1519 = vdwg.mxu0
        %v1521 = vsel %vm1005, %v1432, 0
        %1523 = vmatpush.bf16.msra.mxu0 0
        %1524 = vmatpush.bf16.msra.mxu0 0
        %1525 = vmatpush.bf16.msra.mxu0 0
        %1526 = vmatpush.bf16.msra.mxu0 0
        %1527 = vmatpush.bf16.msra.mxu0 0
        %1528 = vmatpush.bf16.msra.mxu0 0
        %1529 = vmatpush.bf16.msra.mxu0 %v1483
        %1530 = vmatpush.bf16.msra.mxu0 %v1482
        %1531 = vmatmul.bf16.gmra.mxu0 %v1521
        %v1532 = vpop.f32.mrf.mxu0
        %v1533 = vadd.f32 0.0, %v1532
        %v1534 = vpop.f32.mrf.mxu0
        %1535 = vdwg.mxu0
        %v1537 = vsel %vm1005, %v1448, 0
        %1539 = vmatpush.bf16.msra.mxu0 0
        %1540 = vmatpush.bf16.msra.mxu0 0
        %1541 = vmatpush.bf16.msra.mxu0 0
        %1542 = vmatpush.bf16.msra.mxu0 0
        %1543 = vmatpush.bf16.msra.mxu0 0
        %1544 = vmatpush.bf16.msra.mxu0 0
        %1545 = vmatpush.bf16.msra.mxu0 %v1485
        %1546 = vmatpush.bf16.msra.mxu0 %v1484
        %1547 = vmatmul.bf16.gmra.mxu0 %v1537
        %v1548 = vpop.f32.mrf.mxu0
        %v1549 = vadd.f32 0.0, %v1548
        %v1550 = vpop.f32.mrf.mxu0
        %1551 = vdwg.mxu0
        %v1553 = vsel %vm1005, %v1464, 0
        %1555 = vmatpush.bf16.msra.mxu0 0
        %1556 = vmatpush.bf16.msra.mxu0 0
        %1557 = vmatpush.bf16.msra.mxu0 0
        %1558 = vmatpush.bf16.msra.mxu0 0
        %1559 = vmatpush.bf16.msra.mxu0 0
        %1560 = vmatpush.bf16.msra.mxu0 0
        %1561 = vmatpush.bf16.msra.mxu0 %v1487
        %1562 = vmatpush.bf16.msra.mxu0 %v1486
        %1563 = vmatmul.bf16.gmra.mxu0 %v1553
        %v1564 = vpop.f32.mrf.mxu0
        %v1565 = vadd.f32 0.0, %v1564
        %v1566 = vpop.f32.mrf.mxu0
        %1567 = vdwg.mxu0
        %v1568 = vsel %vm1070, %v1517, -inf
        %1569 = vmax.xlane.f32.xlu0 %v1568
        %v1570 = vpop.xlane.xlu0 %1569
        %v1571 = vsel %vm1070, %v1533, -inf
        %1572 = vmax.xlane.f32.xlu0 %v1571
        %v1573 = vpop.xlane.xlu0 %1572
        %v1574 = vsel %vm1070, %v1549, -inf
        %1575 = vmax.xlane.f32.xlu0 %v1574
        %v1576 = vpop.xlane.xlu0 %1575
        %v1577 = vsel %vm1070, %v1565, -inf
        %1578 = vmax.xlane.f32.xlu0 %v1577
        %v1579 = vpop.xlane.xlu0 %1578
        %v1580 = vsub.f32 %v1517, %v1570
        %v1581 = vsub.f32 %v1533, %v1573
        %v1582 = vsub.f32 %v1549, %v1576
        %v1583 = vsub.f32 %v1565, %v1579
        %v1584 = vmul.f32 %v1580, 1.442695
        %v1585 = vpow.pop %v1584
        %v1586 = vmul.f32 %v1581, 1.442695
        %v1587 = vpow.pop %v1586
        %v1588 = vmul.f32 %v1582, 1.442695
        %v1589 = vpow.pop %v1588
        %v1590 = vmul.f32 %v1583, 1.442695
        %v1591 = vpow.pop %v1590
        %v1592 = vsel %vm1070, %v1585, 0.0
        %1593 = vadd.xlane.f32.xlu0 %v1592
        %v1594 = vpop.xlane.xlu0 %1593
        %v1595 = vsel %vm1070, %v1587, 0.0
        %1596 = vadd.xlane.f32.xlu0 %v1595
        %v1597 = vpop.xlane.xlu0 %1596
        %v1598 = vsel %vm1070, %v1589, 0.0
        %1599 = vadd.xlane.f32.xlu0 %v1598
        %v1600 = vpop.xlane.xlu0 %1599
        %v1601 = vsel %vm1070, %v1591, 0.0
        %1602 = vadd.xlane.f32.xlu0 %v1601
        %v1603 = vpop.xlane.xlu0 %1602
        %v1604 = vrcp.pop %v1594
        %v1605 = vrcp.pop %v1597
        %v1606 = vrcp.pop %v1600
        %v1607 = vrcp.pop %v1603
        %v1608 = vmul.f32 %v1585, %v1604
        %v1609 = vmul.f32 %v1587, %v1605
        %v1610 = vmul.f32 %v1589, %v1606
        %v1611 = vmul.f32 %v1591, %v1607
        %v1612 = vpack.c.bf16 %v1608, %v1608
        %v1613 = vpack.c.bf16 %v1609, %v1609
        %v1614 = vpack.c.bf16 %v1610, %v1610
        %v1615 = vpack.c.bf16 %v1611, %v1611
        %v1617 = vsel %vm1070, %v1612, 0
        %v1620 = vsel %vm1070, %v1496, 0
        %v1623 = vsel %vm1070, %v1497, 0
        %1625 = vmatpush.bf16.xpose.msra.mxu0 0
        %1626 = vmatpush.bf16.xpose.msra.mxu0 0
        %1627 = vmatpush.bf16.xpose.msra.mxu0 0
        %1628 = vmatpush.bf16.xpose.msra.mxu0 0
        %1629 = vmatpush.bf16.xpose.msra.mxu0 0
        %1630 = vmatpush.bf16.xpose.msra.mxu0 0
        %1631 = vmatpush.bf16.xpose.msra.mxu0 %v1623
        %1632 = vmatpush.bf16.xpose.msra.mxu0 %v1620
        %1633 = vmatmul.bf16.gmra.mxu0 %v1617
        %v1634 = vpop.f32.mrf.mxu0
        %v1635 = vadd.f32 0.0, %v1634
        %v1636 = vpop.f32.mrf.mxu0
        %1637 = vdwg.mxu0
        %v1639 = vsel %vm1070, %v1613, 0
        %v1642 = vsel %vm1070, %v1498, 0
        %v1645 = vsel %vm1070, %v1499, 0
        %1647 = vmatpush.bf16.xpose.msra.mxu0 0
        %1648 = vmatpush.bf16.xpose.msra.mxu0 0
        %1649 = vmatpush.bf16.xpose.msra.mxu0 0
        %1650 = vmatpush.bf16.xpose.msra.mxu0 0
        %1651 = vmatpush.bf16.xpose.msra.mxu0 0
        %1652 = vmatpush.bf16.xpose.msra.mxu0 0
        %1653 = vmatpush.bf16.xpose.msra.mxu0 %v1645
        %1654 = vmatpush.bf16.xpose.msra.mxu0 %v1642
        %1655 = vmatmul.bf16.gmra.mxu0 %v1639
        %v1656 = vpop.f32.mrf.mxu0
        %v1657 = vadd.f32 0.0, %v1656
        %v1658 = vpop.f32.mrf.mxu0
        %1659 = vdwg.mxu0
        %v1661 = vsel %vm1070, %v1614, 0
        %v1664 = vsel %vm1070, %v1500, 0
        %v1667 = vsel %vm1070, %v1501, 0
        %1669 = vmatpush.bf16.xpose.msra.mxu0 0
        %1670 = vmatpush.bf16.xpose.msra.mxu0 0
        %1671 = vmatpush.bf16.xpose.msra.mxu0 0
        %1672 = vmatpush.bf16.xpose.msra.mxu0 0
        %1673 = vmatpush.bf16.xpose.msra.mxu0 0
        %1674 = vmatpush.bf16.xpose.msra.mxu0 0
        %1675 = vmatpush.bf16.xpose.msra.mxu0 %v1667
        %1676 = vmatpush.bf16.xpose.msra.mxu0 %v1664
        %1677 = vmatmul.bf16.gmra.mxu0 %v1661
        %v1678 = vpop.f32.mrf.mxu0
        %v1679 = vadd.f32 0.0, %v1678
        %v1680 = vpop.f32.mrf.mxu0
        %1681 = vdwg.mxu0
        %v1683 = vsel %vm1070, %v1615, 0
        %v1686 = vsel %vm1070, %v1502, 0
        %v1689 = vsel %vm1070, %v1503, 0
        %1691 = vmatpush.bf16.xpose.msra.mxu0 0
        %1692 = vmatpush.bf16.xpose.msra.mxu0 0
        %1693 = vmatpush.bf16.xpose.msra.mxu0 0
        %1694 = vmatpush.bf16.xpose.msra.mxu0 0
        %1695 = vmatpush.bf16.xpose.msra.mxu0 0
        %1696 = vmatpush.bf16.xpose.msra.mxu0 0
        %1697 = vmatpush.bf16.xpose.msra.mxu0 %v1689
        %1698 = vmatpush.bf16.xpose.msra.mxu0 %v1686
        %1699 = vmatmul.bf16.gmra.mxu0 %v1683
        %v1700 = vpop.f32.mrf.mxu0
        %v1701 = vadd.f32 0.0, %v1700
        %v1702 = vpop.f32.mrf.mxu0
        %1703 = vdwg.mxu0
        %1704 = vxpose.xlu0.b32.start [1/16] %v1635, 128
        %1705 = vxpose.xlu0.b32.cont [2/16] 0.0, 128
        %1706 = vxpose.xlu0.b32.cont [3/16] 0.0, 128
        %1707 = vxpose.xlu0.b32.cont [4/16] 0.0, 128
        %1708 = vxpose.xlu0.b32.cont [5/16] 0.0, 128
        %1709 = vxpose.xlu0.b32.cont [6/16] 0.0, 128
        %1710 = vxpose.xlu0.b32.cont [7/16] 0.0, 128
        %1711 = vxpose.xlu0.b32.cont [8/16] 0.0, 128
        %1712 = vxpose.xlu0.b32.cont [9/16] 0.0, 128
        %1713 = vxpose.xlu0.b32.cont [10/16] 0.0, 128
        %1714 = vxpose.xlu0.b32.cont [11/16] 0.0, 128
        %1715 = vxpose.xlu0.b32.cont [12/16] 0.0, 128
        %1716 = vxpose.xlu0.b32.cont [13/16] 0.0, 128
        %1717 = vxpose.xlu0.b32.cont [14/16] 0.0, 128
        %1718 = vxpose.xlu0.b32.cont [15/16] 0.0, 128
        %1719 = vxpose.xlu0.b32.end [16/16] 0.0, 128
        %v1720 = vpop.trf.xlu0
        %v1721 = vpop.trf.xlu0
        %v1722 = vpop.trf.xlu0
        %v1723 = vpop.trf.xlu0
        %v1724 = vpop.trf.xlu0
        %v1725 = vpop.trf.xlu0
        %v1726 = vpop.trf.xlu0
        %v1727 = vpop.trf.xlu0
        %v1728 = vpop.trf.xlu0
        %v1729 = vpop.trf.xlu0
        %v1730 = vpop.trf.xlu0
        %v1731 = vpop.trf.xlu0
        %v1732 = vpop.trf.xlu0
        %v1733 = vpop.trf.xlu0
        %v1734 = vpop.trf.xlu0
        %v1735 = vpop.trf.xlu0
        %1736 = vxpose.xlu0.b32.start [1/16] %v1657, 128
        %1737 = vxpose.xlu0.b32.cont [2/16] 0.0, 128
        %1738 = vxpose.xlu0.b32.cont [3/16] 0.0, 128
        %1739 = vxpose.xlu0.b32.cont [4/16] 0.0, 128
        %1740 = vxpose.xlu0.b32.cont [5/16] 0.0, 128
        %1741 = vxpose.xlu0.b32.cont [6/16] 0.0, 128
        %1742 = vxpose.xlu0.b32.cont [7/16] 0.0, 128
        %1743 = vxpose.xlu0.b32.cont [8/16] 0.0, 128
        %1744 = vxpose.xlu0.b32.cont [9/16] 0.0, 128
        %1745 = vxpose.xlu0.b32.cont [10/16] 0.0, 128
        %1746 = vxpose.xlu0.b32.cont [11/16] 0.0, 128
        %1747 = vxpose.xlu0.b32.cont [12/16] 0.0, 128
        %1748 = vxpose.xlu0.b32.cont [13/16] 0.0, 128
        %1749 = vxpose.xlu0.b32.cont [14/16] 0.0, 128
        %1750 = vxpose.xlu0.b32.cont [15/16] 0.0, 128
        %1751 = vxpose.xlu0.b32.end [16/16] 0.0, 128
        %v1752 = vpop.trf.xlu0
        %v1753 = vpop.trf.xlu0
        %v1754 = vpop.trf.xlu0
        %v1755 = vpop.trf.xlu0
        %v1756 = vpop.trf.xlu0
        %v1757 = vpop.trf.xlu0
        %v1758 = vpop.trf.xlu0
        %v1759 = vpop.trf.xlu0
        %v1760 = vpop.trf.xlu0
        %v1761 = vpop.trf.xlu0
        %v1762 = vpop.trf.xlu0
        %v1763 = vpop.trf.xlu0
        %v1764 = vpop.trf.xlu0
        %v1765 = vpop.trf.xlu0
        %v1766 = vpop.trf.xlu0
        %v1767 = vpop.trf.xlu0
        %1768 = vxpose.xlu0.b32.start [1/16] %v1679, 128
        %1769 = vxpose.xlu0.b32.cont [2/16] 0.0, 128
        %1770 = vxpose.xlu0.b32.cont [3/16] 0.0, 128
        %1771 = vxpose.xlu0.b32.cont [4/16] 0.0, 128
        %1772 = vxpose.xlu0.b32.cont [5/16] 0.0, 128
        %1773 = vxpose.xlu0.b32.cont [6/16] 0.0, 128
        %1774 = vxpose.xlu0.b32.cont [7/16] 0.0, 128
        %1775 = vxpose.xlu0.b32.cont [8/16] 0.0, 128
        %1776 = vxpose.xlu0.b32.cont [9/16] 0.0, 128
        %1777 = vxpose.xlu0.b32.cont [10/16] 0.0, 128
        %1778 = vxpose.xlu0.b32.cont [11/16] 0.0, 128
        %1779 = vxpose.xlu0.b32.cont [12/16] 0.0, 128
        %1780 = vxpose.xlu0.b32.cont [13/16] 0.0, 128
        %1781 = vxpose.xlu0.b32.cont [14/16] 0.0, 128
        %1782 = vxpose.xlu0.b32.cont [15/16] 0.0, 128
        %1783 = vxpose.xlu0.b32.end [16/16] 0.0, 128
        %v1784 = vpop.trf.xlu0
        %v1785 = vpop.trf.xlu0
        %v1786 = vpop.trf.xlu0
        %v1787 = vpop.trf.xlu0
        %v1788 = vpop.trf.xlu0
        %v1789 = vpop.trf.xlu0
        %v1790 = vpop.trf.xlu0
        %v1791 = vpop.trf.xlu0
        %v1792 = vpop.trf.xlu0
        %v1793 = vpop.trf.xlu0
        %v1794 = vpop.trf.xlu0
        %v1795 = vpop.trf.xlu0
        %v1796 = vpop.trf.xlu0
        %v1797 = vpop.trf.xlu0
        %v1798 = vpop.trf.xlu0
        %v1799 = vpop.trf.xlu0
        %1800 = vxpose.xlu0.b32.start [1/16] %v1701, 128
        %1801 = vxpose.xlu0.b32.cont [2/16] 0.0, 128
        %1802 = vxpose.xlu0.b32.cont [3/16] 0.0, 128
        %1803 = vxpose.xlu0.b32.cont [4/16] 0.0, 128
        %1804 = vxpose.xlu0.b32.cont [5/16] 0.0, 128
        %1805 = vxpose.xlu0.b32.cont [6/16] 0.0, 128
        %1806 = vxpose.xlu0.b32.cont [7/16] 0.0, 128
        %1807 = vxpose.xlu0.b32.cont [8/16] 0.0, 128
        %1808 = vxpose.xlu0.b32.cont [9/16] 0.0, 128
        %1809 = vxpose.xlu0.b32.cont [10/16] 0.0, 128
        %1810 = vxpose.xlu0.b32.cont [11/16] 0.0, 128
        %1811 = vxpose.xlu0.b32.cont [12/16] 0.0, 128
        %1812 = vxpose.xlu0.b32.cont [13/16] 0.0, 128
        %1813 = vxpose.xlu0.b32.cont [14/16] 0.0, 128
        %1814 = vxpose.xlu0.b32.cont [15/16] 0.0, 128
        %1815 = vxpose.xlu0.b32.end [16/16] 0.0, 128
        %v1816 = vpop.trf.xlu0
        %v1817 = vpop.trf.xlu0
        %v1818 = vpop.trf.xlu0
        %v1819 = vpop.trf.xlu0
        %v1820 = vpop.trf.xlu0
        %v1821 = vpop.trf.xlu0
        %v1822 = vpop.trf.xlu0
        %v1823 = vpop.trf.xlu0
        %v1824 = vpop.trf.xlu0
        %v1825 = vpop.trf.xlu0
        %v1826 = vpop.trf.xlu0
        %v1827 = vpop.trf.xlu0
        %v1828 = vpop.trf.xlu0
        %v1829 = vpop.trf.xlu0
        %v1830 = vpop.trf.xlu0
        %v1831 = vpop.trf.xlu0
        %1832 = vxpose.xlu0.b32.start [1/16] %v1720, 128
        %1833 = vxpose.xlu0.b32.cont [2/16] %v1721, 128
        %1834 = vxpose.xlu0.b32.cont [3/16] %v1722, 128
        %1835 = vxpose.xlu0.b32.cont [4/16] %v1723, 128
        %1836 = vxpose.xlu0.b32.cont [5/16] %v1752, 128
        %1837 = vxpose.xlu0.b32.cont [6/16] %v1753, 128
        %1838 = vxpose.xlu0.b32.cont [7/16] %v1754, 128
        %1839 = vxpose.xlu0.b32.cont [8/16] %v1755, 128
        %1840 = vxpose.xlu0.b32.cont [9/16] %v1784, 128
        %1841 = vxpose.xlu0.b32.cont [10/16] %v1785, 128
        %1842 = vxpose.xlu0.b32.cont [11/16] %v1786, 128
        %1843 = vxpose.xlu0.b32.cont [12/16] %v1787, 128
        %1844 = vxpose.xlu0.b32.cont [13/16] %v1816, 128
        %1845 = vxpose.xlu0.b32.cont [14/16] %v1817, 128
        %1846 = vxpose.xlu0.b32.cont [15/16] %v1818, 128
        %1847 = vxpose.xlu0.b32.end [16/16] %v1819, 128
        %v1848 = vpop.trf.xlu0
        %v1849 = vpop.trf.xlu0
        %v1850 = vpop.trf.xlu0
        %v1851 = vpop.trf.xlu0
        %v1852 = vpop.trf.xlu0
        %v1853 = vpop.trf.xlu0
        %v1854 = vpop.trf.xlu0
        %v1855 = vpop.trf.xlu0
        %v1856 = vpop.trf.xlu0
        %v1857 = vpop.trf.xlu0
        %v1858 = vpop.trf.xlu0
        %v1859 = vpop.trf.xlu0
        %v1860 = vpop.trf.xlu0
        %v1861 = vpop.trf.xlu0
        %v1862 = vpop.trf.xlu0
        %v1863 = vpop.trf.xlu0
        %v1864 = vpack.c.bf16 %v1848, %v1351
        %v1865 = vld [vmem:[#allocation10] sm:$0xf]
        %v1866 = vld [vmem:[#allocation10 + $0x4] sm:$0xf]
        %v1867 = vld [vmem:[#allocation10 + $0x8] sm:$0xf]
        %v1868 = vld [vmem:[#allocation10 + $0xc] sm:$0xf]
        %v1869 = vld [vmem:[#allocation10 + $0x10] sm:$0xf]
        %v1870 = vld [vmem:[#allocation10 + $0x14] sm:$0xf]
        %v1871 = vld [vmem:[#allocation10 + $0x18] sm:$0xf]
        %v1872 = vld [vmem:[#allocation10 + $0x1c] sm:$0xf]
        %v1873 = vld [vmem:[#allocation10 + $0x20] sm:$0xf]
        %v1874 = vld [vmem:[#allocation10 + $0x24] sm:$0xf]
        %v1875 = vld [vmem:[#allocation10 + $0x28] sm:$0xf]
        %v1876 = vld [vmem:[#allocation10 + $0x2c] sm:$0xf]
        %v1877 = vld [vmem:[#allocation10 + $0x30] sm:$0xf]
        %v1878 = vld [vmem:[#allocation10 + $0x34] sm:$0xf]
        %v1879 = vld [vmem:[#allocation10 + $0x38] sm:$0xf]
        %v1880 = vld [vmem:[#allocation10 + $0x3c] sm:$0xf]
        %v1897 = vunpack.c.l.b16 %v1865
        %v1898 = vunpack.c.l.b16 %v1866
        %v1899 = vunpack.c.l.b16 %v1867
        %v1900 = vunpack.c.l.b16 %v1868
        %v1901 = vunpack.c.l.b16 %v1869
        %v1902 = vunpack.c.l.b16 %v1870
        %v1903 = vunpack.c.l.b16 %v1871
        %v1904 = vunpack.c.l.b16 %v1872
        %v1905 = vunpack.c.l.b16 %v1873
        %v1906 = vunpack.c.l.b16 %v1874
        %v1907 = vunpack.c.l.b16 %v1875
        %v1908 = vunpack.c.l.b16 %v1876
        %v1909 = vunpack.c.l.b16 %v1877
        %v1910 = vunpack.c.l.b16 %v1878
        %v1911 = vunpack.c.l.b16 %v1879
        %v1912 = vunpack.c.l.b16 %v1880
        %v1913 = vpack.c.b16 %v1898, %v1897
        %v1914 = vpack.c.b16 %v1900, %v1899
        %v1915 = vpack.c.b16 %v1902, %v1901
        %v1916 = vpack.c.b16 %v1904, %v1903
        %v1917 = vpack.c.b16 %v1906, %v1905
        %v1918 = vpack.c.b16 %v1908, %v1907
        %v1919 = vpack.c.b16 %v1910, %v1909
        %v1920 = vpack.c.b16 %v1912, %v1911
        %1929 = vmatpush.bf16.msra.mxu0 %v1920
        %1930 = vmatpush.bf16.msra.mxu0 %v1919
        %1931 = vmatpush.bf16.msra.mxu0 %v1918
        %1932 = vmatpush.bf16.msra.mxu0 %v1917
        %1933 = vmatpush.bf16.msra.mxu0 %v1916
        %1934 = vmatpush.bf16.msra.mxu0 %v1915
        %1935 = vmatpush.bf16.msra.mxu0 %v1914
        %1936 = vmatpush.bf16.msra.mxu0 %v1913
        %1937 = vmatmul.bf16.gmra.mxu0 %v1864
        %v1938 = vpop.f32.mrf.mxu0
        %v1939 = vadd.f32 0.0, %v1938
        %v1940 = vpop.f32.mrf.mxu0
        %v1941 = vadd.f32 0.0, %v1940
        %1942 = vdwg.mxu0
        %1943 = vst [vmem:[%s444] sm:$0xff] %v1939
        %1944 = vst [vmem:[%s444 + $0x8] sm:$0xff] %v1941
        %s1945 = sand.u32 %s237, 1
        %s1946 = scalar_lea.sflag [#allocation4], %s1945
        %s1947 = sand.u32 %s237, 1
        %s1948 = smul.addr %s1947, 16
        %s1949 = scalar_lea.vmem [#allocation11], %s1948
        // Predicated region
        $region77: #{tpu_custom_call.1} parent=55 // pred_check
          %p1950 = pneg %p247
        $region78: #{tpu_custom_call.1} parent=55 // pred_check_branch
          %1952 = sbr.rel (%p1950) target = $region80
        $region79: #{tpu_custom_call.1} parent=55 // pred_region
          %s1953 = smul.u32 2, %s30
          %1955 = vsyncadd %s1946, 0
          %s1956 = smul.addr %s1953, 8
          %s1957 = scalar_lea.hbm %s9, %s1956
          %s1958 = sshll.u32 %s1949, 4
          %s1959 = int_to_ptr.vmem [resolvable:$true] %s1958
          %s1960 = sshll.u32 %s1957, 4
          %s1961 = int_to_ptr.hbm [resolvable:$true] %s1960
          %1966 = dma.vmem_to_hbm [thread:$0]  %s1959, 256, %s1961, %s1946, 128, 128, 8
        $region80: #{tpu_custom_call.1} parent=55 // pred_fallthru
          _
      $region56: #{tpu_custom_call.1} parent=5 // pred_fallthru
        _
      %p1967 = scmp.le.s32.totalorder 2, %s25
      // Predicated region
      $region81: #{tpu_custom_call.1} parent=5 // pred_check
        %p1968 = pneg %p1967
      $region82: #{tpu_custom_call.1} parent=5 // pred_check_branch
        %1970 = sbr.rel (%p1968) target = $region84
      $region83: #{tpu_custom_call.1} parent=5 // pred_region
        %s1971 = ssub.s32 %s25, 2
        // Predicated region
        $region85: #{tpu_custom_call.1} parent=83 // pred_check
          %p1972 = pneg %p253
        $region86: #{tpu_custom_call.1} parent=83 // pred_check_branch
          %1974 = sbr.rel (%p1972) target = $region88
        $region87: #{tpu_custom_call.1} parent=83 // pred_region
          %s1975 = sand.u32 %s238, 1
          %s1976 = scalar_lea.sflag [#allocation4], %s1975
          %s1977 = sand.u32 %s238, 1
          %s1978 = smul.addr %s1977, 16
          %s1979 = scalar_lea.vmem [#allocation11], %s1978
          %1981 = dma.done %s1976, 256
        $region88: #{tpu_custom_call.1} parent=83 // pred_fallthru
          _
      $region84: #{tpu_custom_call.1} parent=5 // pred_fallthru
        _
    $region6: #{tpu_custom_call.1} parent=1 // loop_footer
      %s29 = sadd.s32 1, %s25
    $region7: #{tpu_custom_call.1} parent=1 // loop_footer_branch
      %24 = sbr.rel target = $region3
    $region8: #{tpu_custom_call.1} parent=1 // loop_exit
      _
    %1982 = vsyncpa [#allocation3], 1
    %s1983 = scalar_lea.sflag [#allocation3], 1
    %1984 = vsyncpa %s1983, 1
    %1985 = vsyncpa [#allocation6], 1
    %s1986 = scalar_lea.sflag [#allocation6], 1
    %1987 = vsyncpa %s1986, 1
    %1988 = vsyncpa [#allocation9], 1
    %1989 = vsyncpa [#allocation4], 1
    %s1990 = scalar_lea.sflag [#allocation4], 1
    %1991 = vsyncpa %s1990, 1

</llo_original>
